<compile_context>
chip_gen: v7x
topology: tpu7x:2x2x1
jax: 0.10.0
libtpu: 0.0.40
codegen_flags: <defaults>
</compile_context>

<pallas_src>
import jax
import jax.numpy as jnp
from jax.experimental import pallas as pl
from jax.experimental.pallas import tpu as pltpu

B, S, D_IN, D_HID, D_OUT = 3, 64, 256, 1024, 256
M = B * S  # 192 rows (divisible by 8 -> valid sublane tiling)

# FLOPs: 2*M*(D_IN*D_HID + D_HID*D_OUT) = 2*192*524288 ~= 2.0e8
_FLOPS = 2 * M * (D_IN * D_HID + D_HID * D_OUT)
# HBM bytes: x f32 + w0/w1 bf16 + biases f32 + out f32 ~= 1.45e6
_BYTES = (M * D_IN * 4) + (D_IN * D_HID * 2) + (D_HID * D_OUT * 2) \
         + (D_HID * 4) + (D_OUT * 4) + (M * D_OUT * 4)


def mlp_kernel(x_ref, w0_ref, b0_ref, w1_ref, b1_ref, o_ref):
    # Cast x f32 -> bf16 in-kernel (VPU, hidden under weight DMA).
    x_bf = x_ref[...].astype(jnp.bfloat16)
    # lin0: (192, 256)bf16 @ (256, 1024)bf16 -> f32 accumulate on the MXU.
    h = jnp.dot(x_bf, w0_ref[...], preferred_element_type=jnp.float32)
    # bias (already includes the folded all-ones const row) + ReLU, in f32.
    h = jnp.maximum(h + b0_ref[...], 0.0)
    # lin1: (192, 1024)bf16 @ (1024, 256)bf16 -> f32 accumulate.
    y = jnp.dot(h.astype(jnp.bfloat16), w1_ref[...],
                preferred_element_type=jnp.float32)
    o_ref[...] = (y + b1_ref[...]).astype(o_ref.dtype)


def mlp_forward(x, w0_t_bf16, b0_fused, w1_t_bf16, b1):
    """x: (B, S, D_IN) f32.  Weights already bf16 & transposed; b0_fused is
    (1, D_HID) f32 with the token-invariant `const` row folded in."""
    x2 = x.reshape(M, D_IN)                       # free metadata reshape, f32
    b1_2 = b1.reshape(1, D_OUT).astype(jnp.float32)

    vmem_spec = pl.BlockSpec(memory_space=pltpu.MemorySpace.VMEM)
    out = pl.pallas_call(
        mlp_kernel,
        out_shape=jax.ShapeDtypeStruct((M, D_OUT), jnp.float32),
        # No grid: single invocation, full arrays resident in VMEM (~2 MiB),
        # no double-buffering / pipeline prologue overhead.
        in_specs=[vmem_spec] * 5,
        out_specs=vmem_spec,
        cost_estimate=pl.CostEstimate(
            flops=_FLOPS, transcendentals=0, bytes_accessed=_BYTES),
    )(x2, w0_t_bf16, b0_fused, w1_t_bf16, b1_2)

    return out.reshape(B, S, D_OUT)


def reference(x, w0_t, b0, const, w1_t, b1):
    # Full-precision reference with the original (un-folded) module semantics.
    h = jnp.einsum("bsk,kh->bsh", x, w0_t) + b0
    h = jnp.maximum(h + const, 0.0)
    return jnp.einsum("bsh,ho->bso", h, w1_t) + b1


if __name__ == "__main__":
    key = jax.random.PRNGKey(0)
    kx, kw0, kb0, kw1, kb1 = jax.random.split(key, 5)

    x = jax.random.normal(kx, (B, S, D_IN), dtype=jnp.float32)

    # Deterministic parameter init (uniform, PyTorch-Linear-style bounds).
    bound0 = 1.0 / (D_IN ** 0.5)
    w0 = jax.random.uniform(kw0, (D_HID, D_IN), minval=-bound0, maxval=bound0)
    b0 = jax.random.uniform(kb0, (D_HID,), minval=-bound0, maxval=bound0)
    bound1 = 1.0 / (D_HID ** 0.5)
    w1 = jax.random.uniform(kw1, (D_OUT, D_HID), minval=-bound1, maxval=bound1)
    b1 = jax.random.uniform(kb1, (D_OUT,), minval=-bound1, maxval=bound1)

    const = jnp.ones((B, S, D_HID), dtype=jnp.float32)  # registered buffer

    # ---- one-time parameter preparation (NOT per-call work) ----
    # Pre-transpose + pre-cast weights to bf16 so the per-call HBM stream is
    # the bf16 weights only.
    w0_t = w0.T                                   # (256, 1024) f32 (for ref)
    w1_t = w1.T                                   # (1024, 256) f32 (for ref)
    w0_t_bf16 = w0_t.astype(jnp.bfloat16)
    w1_t_bf16 = w1_t.astype(jnp.bfloat16)
    # Fold the registered `const` buffer into the first-layer bias using a
    # single row. Valid because the buffer is all-ones / token-invariant; if
    # it were ever non-uniform across (b, s) this fold would be wrong.
    const_row = const[0, 0:1, :]                  # (1, 1024), folded once
    b0_fused = (b0.reshape(1, D_HID) + const_row).astype(jnp.float32)

    out = mlp_forward(x, w0_t_bf16, b0_fused, w1_t_bf16, b1)
    out = jax.block_until_ready(out)

    ref = reference(x, w0_t, b0, const, w1_t, b1)
    assert out.shape == (B, S, D_OUT), out.shape
    # bf16 matmul operands with f32 accumulation -> loosened tolerance.
    assert jnp.allclose(out, ref, atol=3e-2, rtol=3e-2), "mismatch vs reference"

    print("KERNEL_OK")
</pallas_src>

<mosaic_0001>
module attributes {stable_mosaic.version = 11 : i64} {
  func.func @mlp_kernel(%arg0: memref<192x256xf32, #tpu.memory_space<vmem>>, %arg1: memref<256x1024xbf16, #tpu.memory_space<vmem>>, %arg2: memref<1x1024xf32, #tpu.memory_space<vmem>>, %arg3: memref<1024x256xbf16, #tpu.memory_space<vmem>>, %arg4: memref<1x256xf32, #tpu.memory_space<vmem>>, %arg5: memref<192x256xf32, #tpu.memory_space<vmem>>) attributes {dimension_semantics = [], scalar_prefetch = 0 : i64, scratch_operands = 0 : i64, tpu.core_type = #tpu.core_type<tc>} {
    %c0 = arith.constant 0 : index
    %c0_0 = arith.constant 0 : index
    %0 = vector.load %arg0[%c0, %c0_0] : memref<192x256xf32, #tpu.memory_space<vmem>>, vector<192x256xf32>
    %1 = arith.truncf %0 : vector<192x256xf32> to vector<192x256xbf16>
    %c0_1 = arith.constant 0 : index
    %c0_2 = arith.constant 0 : index
    %2 = vector.load %arg1[%c0_1, %c0_2] : memref<256x1024xbf16, #tpu.memory_space<vmem>>, vector<256x1024xbf16>
    %cst = arith.constant dense<0.000000e+00> : vector<192x1024xf32>
    %3 = tpu.matmul %1, %2, %cst {dimension_numbers = #tpu.dot_dimension_numbers<[1], [0], [0], [1], [0, 0, 1, 1], [], []>} : vector<192x256xbf16>, vector<256x1024xbf16>, vector<192x1024xf32> -> vector<192x1024xf32>
    %c0_3 = arith.constant 0 : index
    %c0_4 = arith.constant 0 : index
    %4 = vector.load %arg2[%c0_3, %c0_4] : memref<1x1024xf32, #tpu.memory_space<vmem>>, vector<1x1024xf32>
    %5 = vector.broadcast %4 : vector<1x1024xf32> to vector<192x1024xf32>
    %6 = arith.addf %3, %5 : vector<192x1024xf32>
    %cst_5 = arith.constant 0.000000e+00 : f32
    %7 = vector.broadcast %cst_5 : f32 to vector<192x1024xf32>
    %8 = arith.maximumf %6, %7 : vector<192x1024xf32>
    %9 = arith.truncf %8 : vector<192x1024xf32> to vector<192x1024xbf16>
    %c0_6 = arith.constant 0 : index
    %c0_7 = arith.constant 0 : index
    %10 = vector.load %arg3[%c0_6, %c0_7] : memref<1024x256xbf16, #tpu.memory_space<vmem>>, vector<1024x256xbf16>
    %cst_8 = arith.constant dense<0.000000e+00> : vector<192x256xf32>
    %11 = tpu.matmul %9, %10, %cst_8 {dimension_numbers = #tpu.dot_dimension_numbers<[1], [0], [0], [1], [0, 0, 1, 1], [], []>} : vector<192x1024xbf16>, vector<1024x256xbf16>, vector<192x256xf32> -> vector<192x256xf32>
    %c0_9 = arith.constant 0 : index
    %c0_10 = arith.constant 0 : index
    %12 = vector.load %arg4[%c0_9, %c0_10] : memref<1x256xf32, #tpu.memory_space<vmem>>, vector<1x256xf32>
    %13 = vector.broadcast %12 : vector<1x256xf32> to vector<192x256xf32>
    %14 = arith.addf %11, %13 : vector<192x256xf32>
    %c0_11 = arith.constant 0 : index
    %c0_12 = arith.constant 0 : index
    %15 = vector.load %arg5[%c0_11, %c0_12] : memref<192x256xf32, #tpu.memory_space<vmem>>, vector<192x256xf32>
    tpu.vector_store %arg5[%c0_11, %c0_12], %14 {strides = array<i32>} : memref<192x256xf32, #tpu.memory_space<vmem>>, vector<192x256xf32>,
    return
  }
}

</mosaic_0001>

<llo_original>
// kernel: tpu_custom_call.1
$region0: #{tpu_custom_call.1}
  #allocation0 [shape = 'u32[]', space=smem, size = 0x4, offset = 0x4, fixed_abs, tag = 'smem constant byte address 0x4 - core index']
  #allocation1 [shape = 'u32[144,128]{1,0:T(1,128)}', space=vmem, size = 0x12000, scoped, tag = 'internal scratch']
  %s0 = inlined_call_operand.hbm [shape: f32[192,256], index: 0, kind: input, shape index: {}]
  %s1 = inlined_call_operand.hbm [shape: bf16[256,1024], index: 1, kind: input, shape index: {}]
  %s2 = inlined_call_operand.hbm [shape: f32[1,1024], index: 2, kind: input, shape index: {}]
  %s3 = inlined_call_operand.hbm [shape: bf16[1024,256], index: 3, kind: input, shape index: {}]
  %s4 = inlined_call_operand.vmem [shape: f32[1,256], index: 4, kind: input, shape index: {}]
  %s5 = inlined_call_operand.hbm [shape: f32[192,256], index: 5, kind: output, shape index: {}]
  %s6 = sld [smem:[#allocation0]]
  $region46: #{tpu_custom_call.1} parent=0
    _
  %s8 = ssub.s32 1, %s6
  %s9 = scalar_select 0, %s8, %s6
  $region1: #{tpu_custom_call.1} parent=0
    #allocation2 [shape = 'u8[196608]{0}', space=vmem, size = 0x30000, scoped, tag = 'input window, operand 0, single buffered']
    #allocation3 [shape = 's32[1]{0}', space=sflag, size = 0x4, scoped, tag = 'scoped memory for tpu_custom_call.1']
    #allocation4 [shape = 's32[1]{0}', space=sflag, size = 0x4, scoped, tag = 'scoped memory for tpu_custom_call.1']
    #allocation5 [shape = 'u8[524288]{0}', space=vmem, size = 0x80000, scoped, tag = 'input window, operand 1, single buffered']
    #allocation6 [shape = 's32[1]{0}', space=sflag, size = 0x4, scoped, tag = 'scoped memory for tpu_custom_call.1']
    #allocation7 [shape = 'u8[4096]{0}', space=vmem, size = 0x1000, scoped, tag = 'input window, operand 2, single buffered']
    #allocation8 [shape = 'u8[524288]{0}', space=vmem, size = 0x80000, scoped, tag = 'input window, operand 3, single buffered']
    #allocation9 [shape = 's32[1]{0}', space=sflag, size = 0x4, scoped, tag = 'scoped memory for tpu_custom_call.1']
    #allocation10 [shape = 'u8[196608]{0}', space=vmem, size = 0x30000, scoped, tag = 'output window, operand 0, single buffered']
    %10 = vsyncpa [#allocation3], 0
    %11 = vsyncpa [#allocation6], 0
    %12 = vsyncpa [#allocation9], 0
    %13 = vsyncpa [#allocation4], 0
    // Predicated region
    $region2: #{tpu_custom_call.1} parent=1 // pred_check
      _
    $region3: #{tpu_custom_call.1} parent=1 // pred_check_branch
      %15 = sbr.rel (0) target = $region5
    $region4: #{tpu_custom_call.1} parent=1 // pred_region
      %s17 = ssub.s32 6144, 6144
      %18 = vsyncadd [#allocation3], %s17
      %s19 = sshll.u32 [#allocation2], 4
      %s20 = int_to_ptr.vmem [resolvable:$true] %s19
      %25 = dma.hbm_to_vmem [thread:$0]  %s0, 6144, %s20, [#allocation3], 256, 256, 16
    $region5: #{tpu_custom_call.1} parent=1 // pred_fallthru
      _
    // Predicated region
    $region6: #{tpu_custom_call.1} parent=1 // pred_check
      _
    $region7: #{tpu_custom_call.1} parent=1 // pred_check_branch
      %27 = sbr.rel (0) target = $region9
    $region8: #{tpu_custom_call.1} parent=1 // pred_region
      %s29 = ssub.s32 16384, 16384
      %30 = vsyncadd [#allocation6], %s29
      %s31 = sshll.u32 [#allocation5], 4
      %s32 = int_to_ptr.vmem [resolvable:$true] %s31
      %37 = dma.hbm_to_vmem [thread:$0]  %s1, 16384, %s32, [#allocation6], 512, 512, 32
    $region9: #{tpu_custom_call.1} parent=1 // pred_fallthru
      _
    // Predicated region
    $region10: #{tpu_custom_call.1} parent=1 // pred_check
      _
    $region11: #{tpu_custom_call.1} parent=1 // pred_check_branch
      %39 = sbr.rel (0) target = $region13
    $region12: #{tpu_custom_call.1} parent=1 // pred_region
      %s41 = ssub.s32 128, 128
      %42 = vsyncadd [#allocation6], %s41
      %s44 = sshll.u32 [#allocation7], 4
      %s45 = int_to_ptr.vmem [resolvable:$true] %s44
      %47 = dma.hbm_to_vmem [thread:$0]  %s2, 128, %s45, [#allocation6]
    $region13: #{tpu_custom_call.1} parent=1 // pred_fallthru
      _
    // Predicated region
    $region14: #{tpu_custom_call.1} parent=1 // pred_check
      _
    $region15: #{tpu_custom_call.1} parent=1 // pred_check_branch
      %49 = sbr.rel (0) target = $region17
    $region16: #{tpu_custom_call.1} parent=1 // pred_region
      %s51 = ssub.s32 16384, 16384
      %52 = vsyncadd [#allocation9], %s51
      %s53 = sshll.u32 [#allocation8], 4
      %s54 = int_to_ptr.vmem [resolvable:$true] %s53
      %59 = dma.hbm_to_vmem [thread:$0]  %s3, 16384, %s54, [#allocation9], 128, 128, 8
    $region17: #{tpu_custom_call.1} parent=1 // pred_fallthru
      _
    // Predicated region
    $region18: #{tpu_custom_call.1} parent=1 // pred_check
      _
    $region19: #{tpu_custom_call.1} parent=1 // pred_check_branch
      %61 = sbr.rel (0) target = $region21
    $region20: #{tpu_custom_call.1} parent=1 // pred_region
      _
    $region21: #{tpu_custom_call.1} parent=1 // pred_fallthru
      _
    // Predicated region
    $region22: #{tpu_custom_call.1} parent=1 // pred_check
      _
    $region23: #{tpu_custom_call.1} parent=1 // pred_check_branch
      %63 = sbr.rel (0) target = $region25
    $region24: #{tpu_custom_call.1} parent=1 // pred_region
      %64 = dma.done [#allocation3], 6144
    $region25: #{tpu_custom_call.1} parent=1 // pred_fallthru
      _
    // Predicated region
    $region26: #{tpu_custom_call.1} parent=1 // pred_check
      _
    $region27: #{tpu_custom_call.1} parent=1 // pred_check_branch
      %66 = sbr.rel (0) target = $region29
    $region28: #{tpu_custom_call.1} parent=1 // pred_region
      %67 = dma.done [#allocation6], 16384
    $region29: #{tpu_custom_call.1} parent=1 // pred_fallthru
      _
    // Predicated region
    $region30: #{tpu_custom_call.1} parent=1 // pred_check
      _
    $region31: #{tpu_custom_call.1} parent=1 // pred_check_branch
      %69 = sbr.rel (0) target = $region33
    $region32: #{tpu_custom_call.1} parent=1 // pred_region
      %70 = dma.done [#allocation6], 128
    $region33: #{tpu_custom_call.1} parent=1 // pred_fallthru
      _
    // Predicated region
    $region34: #{tpu_custom_call.1} parent=1 // pred_check
      _
    $region35: #{tpu_custom_call.1} parent=1 // pred_check_branch
      %72 = sbr.rel (0) target = $region37
    $region36: #{tpu_custom_call.1} parent=1 // pred_region
      %73 = dma.done [#allocation9], 16384
    $region37: #{tpu_custom_call.1} parent=1 // pred_fallthru
      _
    %v74 = vld [vmem:[#allocation2] sm:$0xff]
    %v75 = vld [vmem:[#allocation2 + $0x8] sm:$0xff]
    %v76 = vld [vmem:[#allocation2 + $0x10] sm:$0xff]
    %v77 = vld [vmem:[#allocation2 + $0x18] sm:$0xff]
    %v78 = vld [vmem:[#allocation2 + $0x20] sm:$0xff]
    %v79 = vld [vmem:[#allocation2 + $0x28] sm:$0xff]
    %v80 = vld [vmem:[#allocation2 + $0x30] sm:$0xff]
    %v81 = vld [vmem:[#allocation2 + $0x38] sm:$0xff]
    %v82 = vld [vmem:[#allocation2 + $0x40] sm:$0xff]
    %v83 = vld [vmem:[#allocation2 + $0x48] sm:$0xff]
    %v84 = vld [vmem:[#allocation2 + $0x50] sm:$0xff]
    %v85 = vld [vmem:[#allocation2 + $0x58] sm:$0xff]
    %v86 = vld [vmem:[#allocation2 + $0x60] sm:$0xff]
    %v87 = vld [vmem:[#allocation2 + $0x68] sm:$0xff]
    %v88 = vld [vmem:[#allocation2 + $0x70] sm:$0xff]
    %v89 = vld [vmem:[#allocation2 + $0x78] sm:$0xff]
    %v90 = vld [vmem:[#allocation2 + $0x80] sm:$0xff]
    %v91 = vld [vmem:[#allocation2 + $0x88] sm:$0xff]
    %v92 = vld [vmem:[#allocation2 + $0x90] sm:$0xff]
    %v93 = vld [vmem:[#allocation2 + $0x98] sm:$0xff]
    %v94 = vld [vmem:[#allocation2 + $0xa0] sm:$0xff]
    %v95 = vld [vmem:[#allocation2 + $0xa8] sm:$0xff]
    %v96 = vld [vmem:[#allocation2 + $0xb0] sm:$0xff]
    %v97 = vld [vmem:[#allocation2 + $0xb8] sm:$0xff]
    %v98 = vld [vmem:[#allocation2 + $0xc0] sm:$0xff]
    %v99 = vld [vmem:[#allocation2 + $0xc8] sm:$0xff]
    %v100 = vld [vmem:[#allocation2 + $0xd0] sm:$0xff]
    %v101 = vld [vmem:[#allocation2 + $0xd8] sm:$0xff]
    %v102 = vld [vmem:[#allocation2 + $0xe0] sm:$0xff]
    %v103 = vld [vmem:[#allocation2 + $0xe8] sm:$0xff]
    %v104 = vld [vmem:[#allocation2 + $0xf0] sm:$0xff]
    %v105 = vld [vmem:[#allocation2 + $0xf8] sm:$0xff]
    %v106 = vld [vmem:[#allocation2 + $0x100] sm:$0xff]
    %v107 = vld [vmem:[#allocation2 + $0x108] sm:$0xff]
    %v108 = vld [vmem:[#allocation2 + $0x110] sm:$0xff]
    %v109 = vld [vmem:[#allocation2 + $0x118] sm:$0xff]
    %v110 = vld [vmem:[#allocation2 + $0x120] sm:$0xff]
    %v111 = vld [vmem:[#allocation2 + $0x128] sm:$0xff]
    %v112 = vld [vmem:[#allocation2 + $0x130] sm:$0xff]
    %v113 = vld [vmem:[#allocation2 + $0x138] sm:$0xff]
    %v114 = vld [vmem:[#allocation2 + $0x140] sm:$0xff]
    %v115 = vld [vmem:[#allocation2 + $0x148] sm:$0xff]
    %v116 = vld [vmem:[#allocation2 + $0x150] sm:$0xff]
    %v117 = vld [vmem:[#allocation2 + $0x158] sm:$0xff]
    %v118 = vld [vmem:[#allocation2 + $0x160] sm:$0xff]
    %v119 = vld [vmem:[#allocation2 + $0x168] sm:$0xff]
    %v120 = vld [vmem:[#allocation2 + $0x170] sm:$0xff]
    %v121 = vld [vmem:[#allocation2 + $0x178] sm:$0xff]
    %v122 = vpack.c.bf16 %v76, %v74
    %v123 = vpack.c.bf16 %v77, %v75
    %v124 = vpack.c.bf16 %v80, %v78
    %v125 = vpack.c.bf16 %v81, %v79
    %v126 = vpack.c.bf16 %v84, %v82
    %v127 = vpack.c.bf16 %v85, %v83
    %v128 = vpack.c.bf16 %v88, %v86
    %v129 = vpack.c.bf16 %v89, %v87
    %v130 = vpack.c.bf16 %v92, %v90
    %v131 = vpack.c.bf16 %v93, %v91
    %v132 = vpack.c.bf16 %v96, %v94
    %v133 = vpack.c.bf16 %v97, %v95
    %v134 = vpack.c.bf16 %v100, %v98
    %v135 = vpack.c.bf16 %v101, %v99
    %v136 = vpack.c.bf16 %v104, %v102
    %v137 = vpack.c.bf16 %v105, %v103
    %v138 = vpack.c.bf16 %v108, %v106
    %v139 = vpack.c.bf16 %v109, %v107
    %v140 = vpack.c.bf16 %v112, %v110
    %v141 = vpack.c.bf16 %v113, %v111
    %v142 = vpack.c.bf16 %v116, %v114
    %v143 = vpack.c.bf16 %v117, %v115
    %v144 = vpack.c.bf16 %v120, %v118
    %v145 = vpack.c.bf16 %v121, %v119
    %v146 = vld [vmem:[#allocation5] sm:$0xff]
    %v147 = vld [vmem:[#allocation5 + $0x8] sm:$0xff]
    %v148 = vld [vmem:[#allocation5 + $0x10] sm:$0xff]
    %v149 = vld [vmem:[#allocation5 + $0x18] sm:$0xff]
    %v150 = vld [vmem:[#allocation5 + $0x20] sm:$0xff]
    %v151 = vld [vmem:[#allocation5 + $0x28] sm:$0xff]
    %v152 = vld [vmem:[#allocation5 + $0x30] sm:$0xff]
    %v153 = vld [vmem:[#allocation5 + $0x38] sm:$0xff]
    %v154 = vld [vmem:[#allocation5 + $0x40] sm:$0xff]
    %v155 = vld [vmem:[#allocation5 + $0x48] sm:$0xff]
    %v156 = vld [vmem:[#allocation5 + $0x50] sm:$0xff]
    %v157 = vld [vmem:[#allocation5 + $0x58] sm:$0xff]
    %v158 = vld [vmem:[#allocation5 + $0x60] sm:$0xff]
    %v159 = vld [vmem:[#allocation5 + $0x68] sm:$0xff]
    %v160 = vld [vmem:[#allocation5 + $0x70] sm:$0xff]
    %v161 = vld [vmem:[#allocation5 + $0x78] sm:$0xff]
    %v162 = vld [vmem:[#allocation5 + $0x80] sm:$0xff]
    %v163 = vld [vmem:[#allocation5 + $0x88] sm:$0xff]
    %v164 = vld [vmem:[#allocation5 + $0x90] sm:$0xff]
    %v165 = vld [vmem:[#allocation5 + $0x98] sm:$0xff]
    %v166 = vld [vmem:[#allocation5 + $0xa0] sm:$0xff]
    %v167 = vld [vmem:[#allocation5 + $0xa8] sm:$0xff]
    %v168 = vld [vmem:[#allocation5 + $0xb0] sm:$0xff]
    %v169 = vld [vmem:[#allocation5 + $0xb8] sm:$0xff]
    %v170 = vld [vmem:[#allocation5 + $0xc0] sm:$0xff]
    %v171 = vld [vmem:[#allocation5 + $0xc8] sm:$0xff]
    %v172 = vld [vmem:[#allocation5 + $0xd0] sm:$0xff]
    %v173 = vld [vmem:[#allocation5 + $0xd8] sm:$0xff]
    %v174 = vld [vmem:[#allocation5 + $0xe0] sm:$0xff]
    %v175 = vld [vmem:[#allocation5 + $0xe8] sm:$0xff]
    %v176 = vld [vmem:[#allocation5 + $0xf0] sm:$0xff]
    %v177 = vld [vmem:[#allocation5 + $0xf8] sm:$0xff]
    %v178 = vld [vmem:[#allocation5 + $0x100] sm:$0xff]
    %v179 = vld [vmem:[#allocation5 + $0x108] sm:$0xff]
    %v180 = vld [vmem:[#allocation5 + $0x110] sm:$0xff]
    %v181 = vld [vmem:[#allocation5 + $0x118] sm:$0xff]
    %v182 = vld [vmem:[#allocation5 + $0x120] sm:$0xff]
    %v183 = vld [vmem:[#allocation5 + $0x128] sm:$0xff]
    %v184 = vld [vmem:[#allocation5 + $0x130] sm:$0xff]
    %v185 = vld [vmem:[#allocation5 + $0x138] sm:$0xff]
    %v186 = vld [vmem:[#allocation5 + $0x140] sm:$0xff]
    %v187 = vld [vmem:[#allocation5 + $0x148] sm:$0xff]
    %v188 = vld [vmem:[#allocation5 + $0x150] sm:$0xff]
    %v189 = vld [vmem:[#allocation5 + $0x158] sm:$0xff]
    %v190 = vld [vmem:[#allocation5 + $0x160] sm:$0xff]
    %v191 = vld [vmem:[#allocation5 + $0x168] sm:$0xff]
    %v192 = vld [vmem:[#allocation5 + $0x170] sm:$0xff]
    %v193 = vld [vmem:[#allocation5 + $0x178] sm:$0xff]
    %v194 = vld [vmem:[#allocation5 + $0x180] sm:$0xff]
    %v195 = vld [vmem:[#allocation5 + $0x188] sm:$0xff]
    %v196 = vld [vmem:[#allocation5 + $0x190] sm:$0xff]
    %v197 = vld [vmem:[#allocation5 + $0x198] sm:$0xff]
    %v198 = vld [vmem:[#allocation5 + $0x1a0] sm:$0xff]
    %v199 = vld [vmem:[#allocation5 + $0x1a8] sm:$0xff]
    %v200 = vld [vmem:[#allocation5 + $0x1b0] sm:$0xff]
    %v201 = vld [vmem:[#allocation5 + $0x1b8] sm:$0xff]
    %v202 = vld [vmem:[#allocation5 + $0x1c0] sm:$0xff]
    %v203 = vld [vmem:[#allocation5 + $0x1c8] sm:$0xff]
    %v204 = vld [vmem:[#allocation5 + $0x1d0] sm:$0xff]
    %v205 = vld [vmem:[#allocation5 + $0x1d8] sm:$0xff]
    %v206 = vld [vmem:[#allocation5 + $0x1e0] sm:$0xff]
    %v207 = vld [vmem:[#allocation5 + $0x1e8] sm:$0xff]
    %v208 = vld [vmem:[#allocation5 + $0x1f0] sm:$0xff]
    %v209 = vld [vmem:[#allocation5 + $0x1f8] sm:$0xff]
    %v210 = vld [vmem:[#allocation5 + $0x200] sm:$0xff]
    %v211 = vld [vmem:[#allocation5 + $0x208] sm:$0xff]
    %v212 = vld [vmem:[#allocation5 + $0x210] sm:$0xff]
    %v213 = vld [vmem:[#allocation5 + $0x218] sm:$0xff]
    %v214 = vld [vmem:[#allocation5 + $0x220] sm:$0xff]
    %v215 = vld [vmem:[#allocation5 + $0x228] sm:$0xff]
    %v216 = vld [vmem:[#allocation5 + $0x230] sm:$0xff]
    %v217 = vld [vmem:[#allocation5 + $0x238] sm:$0xff]
    %v218 = vld [vmem:[#allocation5 + $0x240] sm:$0xff]
    %v219 = vld [vmem:[#allocation5 + $0x248] sm:$0xff]
    %v220 = vld [vmem:[#allocation5 + $0x250] sm:$0xff]
    %v221 = vld [vmem:[#allocation5 + $0x258] sm:$0xff]
    %v222 = vld [vmem:[#allocation5 + $0x260] sm:$0xff]
    %v223 = vld [vmem:[#allocation5 + $0x268] sm:$0xff]
    %v224 = vld [vmem:[#allocation5 + $0x270] sm:$0xff]
    %v225 = vld [vmem:[#allocation5 + $0x278] sm:$0xff]
    %v226 = vld [vmem:[#allocation5 + $0x280] sm:$0xff]
    %v227 = vld [vmem:[#allocation5 + $0x288] sm:$0xff]
    %v228 = vld [vmem:[#allocation5 + $0x290] sm:$0xff]
    %v229 = vld [vmem:[#allocation5 + $0x298] sm:$0xff]
    %v230 = vld [vmem:[#allocation5 + $0x2a0] sm:$0xff]
    %v231 = vld [vmem:[#allocation5 + $0x2a8] sm:$0xff]
    %v232 = vld [vmem:[#allocation5 + $0x2b0] sm:$0xff]
    %v233 = vld [vmem:[#allocation5 + $0x2b8] sm:$0xff]
    %v234 = vld [vmem:[#allocation5 + $0x2c0] sm:$0xff]
    %v235 = vld [vmem:[#allocation5 + $0x2c8] sm:$0xff]
    %v236 = vld [vmem:[#allocation5 + $0x2d0] sm:$0xff]
    %v237 = vld [vmem:[#allocation5 + $0x2d8] sm:$0xff]
    %v238 = vld [vmem:[#allocation5 + $0x2e0] sm:$0xff]
    %v239 = vld [vmem:[#allocation5 + $0x2e8] sm:$0xff]
    %v240 = vld [vmem:[#allocation5 + $0x2f0] sm:$0xff]
    %v241 = vld [vmem:[#allocation5 + $0x2f8] sm:$0xff]
    %v242 = vld [vmem:[#allocation5 + $0x300] sm:$0xff]
    %v243 = vld [vmem:[#allocation5 + $0x308] sm:$0xff]
    %v244 = vld [vmem:[#allocation5 + $0x310] sm:$0xff]
    %v245 = vld [vmem:[#allocation5 + $0x318] sm:$0xff]
    %v246 = vld [vmem:[#allocation5 + $0x320] sm:$0xff]
    %v247 = vld [vmem:[#allocation5 + $0x328] sm:$0xff]
    %v248 = vld [vmem:[#allocation5 + $0x330] sm:$0xff]
    %v249 = vld [vmem:[#allocation5 + $0x338] sm:$0xff]
    %v250 = vld [vmem:[#allocation5 + $0x340] sm:$0xff]
    %v251 = vld [vmem:[#allocation5 + $0x348] sm:$0xff]
    %v252 = vld [vmem:[#allocation5 + $0x350] sm:$0xff]
    %v253 = vld [vmem:[#allocation5 + $0x358] sm:$0xff]
    %v254 = vld [vmem:[#allocation5 + $0x360] sm:$0xff]
    %v255 = vld [vmem:[#allocation5 + $0x368] sm:$0xff]
    %v256 = vld [vmem:[#allocation5 + $0x370] sm:$0xff]
    %v257 = vld [vmem:[#allocation5 + $0x378] sm:$0xff]
    %v258 = vld [vmem:[#allocation5 + $0x380] sm:$0xff]
    %v259 = vld [vmem:[#allocation5 + $0x388] sm:$0xff]
    %v260 = vld [vmem:[#allocation5 + $0x390] sm:$0xff]
    %v261 = vld [vmem:[#allocation5 + $0x398] sm:$0xff]
    %v262 = vld [vmem:[#allocation5 + $0x3a0] sm:$0xff]
    %v263 = vld [vmem:[#allocation5 + $0x3a8] sm:$0xff]
    %v264 = vld [vmem:[#allocation5 + $0x3b0] sm:$0xff]
    %v265 = vld [vmem:[#allocation5 + $0x3b8] sm:$0xff]
    %v266 = vld [vmem:[#allocation5 + $0x3c0] sm:$0xff]
    %v267 = vld [vmem:[#allocation5 + $0x3c8] sm:$0xff]
    %v268 = vld [vmem:[#allocation5 + $0x3d0] sm:$0xff]
    %v269 = vld [vmem:[#allocation5 + $0x3d8] sm:$0xff]
    %v270 = vld [vmem:[#allocation5 + $0x3e0] sm:$0xff]
    %v271 = vld [vmem:[#allocation5 + $0x3e8] sm:$0xff]
    %v272 = vld [vmem:[#allocation5 + $0x3f0] sm:$0xff]
    %v273 = vld [vmem:[#allocation5 + $0x3f8] sm:$0xff]
    %v274 = vld [vmem:[#allocation7] sm:$0xff]
    %v276 = vlaneseq
    %v277 = vshrl.u32 %v276, 7
    %v278 = vsub.s32 0, %v277
    %v279 = vrot.slane %v274, %v278
    %v280 = vlaneseq
    %v281 = vshrl.u32 %v280, 7
    %v282 = vsub.s32 1, %v281
    %v283 = vrot.slane %v274, %v282
    %v284 = vlaneseq
    %v285 = vshrl.u32 %v284, 7
    %v286 = vsub.s32 2, %v285
    %v287 = vrot.slane %v274, %v286
    %v288 = vlaneseq
    %v289 = vshrl.u32 %v288, 7
    %v290 = vsub.s32 3, %v289
    %v291 = vrot.slane %v274, %v290
    %v292 = vlaneseq
    %v293 = vshrl.u32 %v292, 7
    %v294 = vsub.s32 4, %v293
    %v295 = vrot.slane %v274, %v294
    %v296 = vlaneseq
    %v297 = vshrl.u32 %v296, 7
    %v298 = vsub.s32 5, %v297
    %v299 = vrot.slane %v274, %v298
    %v300 = vlaneseq
    %v301 = vshrl.u32 %v300, 7
    %v302 = vsub.s32 6, %v301
    %v303 = vrot.slane %v274, %v302
    %v304 = vlaneseq
    %v305 = vshrl.u32 %v304, 7
    %v306 = vsub.s32 7, %v305
    %v307 = vrot.slane %v274, %v306
    %v444 = vunpack.c.l.b16 %v146
    %v445 = vunpack.c.h.b16 %v146
    %v446 = vunpack.c.l.b16 %v147
    %v447 = vunpack.c.h.b16 %v147
    %v448 = vunpack.c.l.b16 %v148
    %v449 = vunpack.c.h.b16 %v148
    %v450 = vunpack.c.l.b16 %v149
    %v451 = vunpack.c.h.b16 %v149
    %v452 = vunpack.c.l.b16 %v150
    %v453 = vunpack.c.h.b16 %v150
    %v454 = vunpack.c.l.b16 %v151
    %v455 = vunpack.c.h.b16 %v151
    %v456 = vunpack.c.l.b16 %v152
    %v457 = vunpack.c.h.b16 %v152
    %v458 = vunpack.c.l.b16 %v153
    %v459 = vunpack.c.h.b16 %v153
    %v460 = vunpack.c.l.b16 %v154
    %v461 = vunpack.c.h.b16 %v154
    %v462 = vunpack.c.l.b16 %v155
    %v463 = vunpack.c.h.b16 %v155
    %v464 = vunpack.c.l.b16 %v156
    %v465 = vunpack.c.h.b16 %v156
    %v466 = vunpack.c.l.b16 %v157
    %v467 = vunpack.c.h.b16 %v157
    %v468 = vunpack.c.l.b16 %v158
    %v469 = vunpack.c.h.b16 %v158
    %v470 = vunpack.c.l.b16 %v159
    %v471 = vunpack.c.h.b16 %v159
    %v472 = vunpack.c.l.b16 %v160
    %v473 = vunpack.c.h.b16 %v160
    %v474 = vunpack.c.l.b16 %v161
    %v475 = vunpack.c.h.b16 %v161
    %v476 = vunpack.c.l.b16 %v162
    %v477 = vunpack.c.h.b16 %v162
    %v478 = vunpack.c.l.b16 %v163
    %v479 = vunpack.c.h.b16 %v163
    %v480 = vunpack.c.l.b16 %v164
    %v481 = vunpack.c.h.b16 %v164
    %v482 = vunpack.c.l.b16 %v165
    %v483 = vunpack.c.h.b16 %v165
    %v484 = vunpack.c.l.b16 %v166
    %v485 = vunpack.c.h.b16 %v166
    %v486 = vunpack.c.l.b16 %v167
    %v487 = vunpack.c.h.b16 %v167
    %v488 = vunpack.c.l.b16 %v168
    %v489 = vunpack.c.h.b16 %v168
    %v490 = vunpack.c.l.b16 %v169
    %v491 = vunpack.c.h.b16 %v169
    %v492 = vunpack.c.l.b16 %v170
    %v493 = vunpack.c.h.b16 %v170
    %v494 = vunpack.c.l.b16 %v171
    %v495 = vunpack.c.h.b16 %v171
    %v496 = vunpack.c.l.b16 %v172
    %v497 = vunpack.c.h.b16 %v172
    %v498 = vunpack.c.l.b16 %v173
    %v499 = vunpack.c.h.b16 %v173
    %v500 = vunpack.c.l.b16 %v174
    %v501 = vunpack.c.h.b16 %v174
    %v502 = vunpack.c.l.b16 %v175
    %v503 = vunpack.c.h.b16 %v175
    %v504 = vunpack.c.l.b16 %v176
    %v505 = vunpack.c.h.b16 %v176
    %v506 = vunpack.c.l.b16 %v177
    %v507 = vunpack.c.h.b16 %v177
    %v508 = vunpack.c.l.b16 %v178
    %v509 = vunpack.c.h.b16 %v178
    %v510 = vunpack.c.l.b16 %v179
    %v511 = vunpack.c.h.b16 %v179
    %v512 = vunpack.c.l.b16 %v180
    %v513 = vunpack.c.h.b16 %v180
    %v514 = vunpack.c.l.b16 %v181
    %v515 = vunpack.c.h.b16 %v181
    %v516 = vunpack.c.l.b16 %v182
    %v517 = vunpack.c.h.b16 %v182
    %v518 = vunpack.c.l.b16 %v183
    %v519 = vunpack.c.h.b16 %v183
    %v520 = vunpack.c.l.b16 %v184
    %v521 = vunpack.c.h.b16 %v184
    %v522 = vunpack.c.l.b16 %v185
    %v523 = vunpack.c.h.b16 %v185
    %v524 = vunpack.c.l.b16 %v186
    %v525 = vunpack.c.h.b16 %v186
    %v526 = vunpack.c.l.b16 %v187
    %v527 = vunpack.c.h.b16 %v187
    %v528 = vunpack.c.l.b16 %v188
    %v529 = vunpack.c.h.b16 %v188
    %v530 = vunpack.c.l.b16 %v189
    %v531 = vunpack.c.h.b16 %v189
    %v532 = vunpack.c.l.b16 %v190
    %v533 = vunpack.c.h.b16 %v190
    %v534 = vunpack.c.l.b16 %v191
    %v535 = vunpack.c.h.b16 %v191
    %v536 = vunpack.c.l.b16 %v192
    %v537 = vunpack.c.h.b16 %v192
    %v538 = vunpack.c.l.b16 %v193
    %v539 = vunpack.c.h.b16 %v193
    %v540 = vunpack.c.l.b16 %v194
    %v541 = vunpack.c.h.b16 %v194
    %v542 = vunpack.c.l.b16 %v195
    %v543 = vunpack.c.h.b16 %v195
    %v544 = vunpack.c.l.b16 %v196
    %v545 = vunpack.c.h.b16 %v196
    %v546 = vunpack.c.l.b16 %v197
    %v547 = vunpack.c.h.b16 %v197
    %v548 = vunpack.c.l.b16 %v198
    %v549 = vunpack.c.h.b16 %v198
    %v550 = vunpack.c.l.b16 %v199
    %v551 = vunpack.c.h.b16 %v199
    %v552 = vunpack.c.l.b16 %v200
    %v553 = vunpack.c.h.b16 %v200
    %v554 = vunpack.c.l.b16 %v201
    %v555 = vunpack.c.h.b16 %v201
    %v556 = vunpack.c.l.b16 %v202
    %v557 = vunpack.c.h.b16 %v202
    %v558 = vunpack.c.l.b16 %v203
    %v559 = vunpack.c.h.b16 %v203
    %v560 = vunpack.c.l.b16 %v204
    %v561 = vunpack.c.h.b16 %v204
    %v562 = vunpack.c.l.b16 %v205
    %v563 = vunpack.c.h.b16 %v205
    %v564 = vunpack.c.l.b16 %v206
    %v565 = vunpack.c.h.b16 %v206
    %v566 = vunpack.c.l.b16 %v207
    %v567 = vunpack.c.h.b16 %v207
    %v568 = vunpack.c.l.b16 %v208
    %v569 = vunpack.c.h.b16 %v208
    %v570 = vunpack.c.l.b16 %v209
    %v571 = vunpack.c.h.b16 %v209
    %v572 = vunpack.c.l.b16 %v210
    %v573 = vunpack.c.h.b16 %v210
    %v574 = vunpack.c.l.b16 %v211
    %v575 = vunpack.c.h.b16 %v211
    %v576 = vunpack.c.l.b16 %v212
    %v577 = vunpack.c.h.b16 %v212
    %v578 = vunpack.c.l.b16 %v213
    %v579 = vunpack.c.h.b16 %v213
    %v580 = vunpack.c.l.b16 %v214
    %v581 = vunpack.c.h.b16 %v214
    %v582 = vunpack.c.l.b16 %v215
    %v583 = vunpack.c.h.b16 %v215
    %v584 = vunpack.c.l.b16 %v216
    %v585 = vunpack.c.h.b16 %v216
    %v586 = vunpack.c.l.b16 %v217
    %v587 = vunpack.c.h.b16 %v217
    %v588 = vunpack.c.l.b16 %v218
    %v589 = vunpack.c.h.b16 %v218
    %v590 = vunpack.c.l.b16 %v219
    %v591 = vunpack.c.h.b16 %v219
    %v592 = vunpack.c.l.b16 %v220
    %v593 = vunpack.c.h.b16 %v220
    %v594 = vunpack.c.l.b16 %v221
    %v595 = vunpack.c.h.b16 %v221
    %v596 = vunpack.c.l.b16 %v222
    %v597 = vunpack.c.h.b16 %v222
    %v598 = vunpack.c.l.b16 %v223
    %v599 = vunpack.c.h.b16 %v223
    %v600 = vunpack.c.l.b16 %v224
    %v601 = vunpack.c.h.b16 %v224
    %v602 = vunpack.c.l.b16 %v225
    %v603 = vunpack.c.h.b16 %v225
    %v604 = vunpack.c.l.b16 %v226
    %v605 = vunpack.c.h.b16 %v226
    %v606 = vunpack.c.l.b16 %v227
    %v607 = vunpack.c.h.b16 %v227
    %v608 = vunpack.c.l.b16 %v228
    %v609 = vunpack.c.h.b16 %v228
    %v610 = vunpack.c.l.b16 %v229
    %v611 = vunpack.c.h.b16 %v229
    %v612 = vunpack.c.l.b16 %v230
    %v613 = vunpack.c.h.b16 %v230
    %v614 = vunpack.c.l.b16 %v231
    %v615 = vunpack.c.h.b16 %v231
    %v616 = vunpack.c.l.b16 %v232
    %v617 = vunpack.c.h.b16 %v232
    %v618 = vunpack.c.l.b16 %v233
    %v619 = vunpack.c.h.b16 %v233
    %v620 = vunpack.c.l.b16 %v234
    %v621 = vunpack.c.h.b16 %v234
    %v622 = vunpack.c.l.b16 %v235
    %v623 = vunpack.c.h.b16 %v235
    %v624 = vunpack.c.l.b16 %v236
    %v625 = vunpack.c.h.b16 %v236
    %v626 = vunpack.c.l.b16 %v237
    %v627 = vunpack.c.h.b16 %v237
    %v628 = vunpack.c.l.b16 %v238
    %v629 = vunpack.c.h.b16 %v238
    %v630 = vunpack.c.l.b16 %v239
    %v631 = vunpack.c.h.b16 %v239
    %v632 = vunpack.c.l.b16 %v240
    %v633 = vunpack.c.h.b16 %v240
    %v634 = vunpack.c.l.b16 %v241
    %v635 = vunpack.c.h.b16 %v241
    %v636 = vunpack.c.l.b16 %v242
    %v637 = vunpack.c.h.b16 %v242
    %v638 = vunpack.c.l.b16 %v243
    %v639 = vunpack.c.h.b16 %v243
    %v640 = vunpack.c.l.b16 %v244
    %v641 = vunpack.c.h.b16 %v244
    %v642 = vunpack.c.l.b16 %v245
    %v643 = vunpack.c.h.b16 %v245
    %v644 = vunpack.c.l.b16 %v246
    %v645 = vunpack.c.h.b16 %v246
    %v646 = vunpack.c.l.b16 %v247
    %v647 = vunpack.c.h.b16 %v247
    %v648 = vunpack.c.l.b16 %v248
    %v649 = vunpack.c.h.b16 %v248
    %v650 = vunpack.c.l.b16 %v249
    %v651 = vunpack.c.h.b16 %v249
    %v652 = vunpack.c.l.b16 %v250
    %v653 = vunpack.c.h.b16 %v250
    %v654 = vunpack.c.l.b16 %v251
    %v655 = vunpack.c.h.b16 %v251
    %v656 = vunpack.c.l.b16 %v252
    %v657 = vunpack.c.h.b16 %v252
    %v658 = vunpack.c.l.b16 %v253
    %v659 = vunpack.c.h.b16 %v253
    %v660 = vunpack.c.l.b16 %v254
    %v661 = vunpack.c.h.b16 %v254
    %v662 = vunpack.c.l.b16 %v255
    %v663 = vunpack.c.h.b16 %v255
    %v664 = vunpack.c.l.b16 %v256
    %v665 = vunpack.c.h.b16 %v256
    %v666 = vunpack.c.l.b16 %v257
    %v667 = vunpack.c.h.b16 %v257
    %v668 = vunpack.c.l.b16 %v258
    %v669 = vunpack.c.h.b16 %v258
    %v670 = vunpack.c.l.b16 %v259
    %v671 = vunpack.c.h.b16 %v259
    %v672 = vunpack.c.l.b16 %v260
    %v673 = vunpack.c.h.b16 %v260
    %v674 = vunpack.c.l.b16 %v261
    %v675 = vunpack.c.h.b16 %v261
    %v676 = vunpack.c.l.b16 %v262
    %v677 = vunpack.c.h.b16 %v262
    %v678 = vunpack.c.l.b16 %v263
    %v679 = vunpack.c.h.b16 %v263
    %v680 = vunpack.c.l.b16 %v264
    %v681 = vunpack.c.h.b16 %v264
    %v682 = vunpack.c.l.b16 %v265
    %v683 = vunpack.c.h.b16 %v265
    %v684 = vunpack.c.l.b16 %v266
    %v685 = vunpack.c.h.b16 %v266
    %v686 = vunpack.c.l.b16 %v267
    %v687 = vunpack.c.h.b16 %v267
    %v688 = vunpack.c.l.b16 %v268
    %v689 = vunpack.c.h.b16 %v268
    %v690 = vunpack.c.l.b16 %v269
    %v691 = vunpack.c.h.b16 %v269
    %v692 = vunpack.c.l.b16 %v270
    %v693 = vunpack.c.h.b16 %v270
    %v694 = vunpack.c.l.b16 %v271
    %v695 = vunpack.c.h.b16 %v271
    %v696 = vunpack.c.l.b16 %v272
    %v697 = vunpack.c.h.b16 %v272
    %v698 = vunpack.c.l.b16 %v273
    %v699 = vunpack.c.h.b16 %v273
    %v700 = vpack.c.b16 %v452, %v444
    %v701 = vpack.c.b16 %v453, %v445
    %v702 = vpack.c.b16 %v454, %v446
    %v703 = vpack.c.b16 %v455, %v447
    %v704 = vpack.c.b16 %v456, %v448
    %v705 = vpack.c.b16 %v457, %v449
    %v706 = vpack.c.b16 %v458, %v450
    %v707 = vpack.c.b16 %v459, %v451
    %v708 = vpack.c.b16 %v468, %v460
    %v709 = vpack.c.b16 %v469, %v461
    %v710 = vpack.c.b16 %v470, %v462
    %v711 = vpack.c.b16 %v471, %v463
    %v712 = vpack.c.b16 %v472, %v464
    %v713 = vpack.c.b16 %v473, %v465
    %v714 = vpack.c.b16 %v474, %v466
    %v715 = vpack.c.b16 %v475, %v467
    %v716 = vpack.c.b16 %v484, %v476
    %v717 = vpack.c.b16 %v485, %v477
    %v718 = vpack.c.b16 %v486, %v478
    %v719 = vpack.c.b16 %v487, %v479
    %v720 = vpack.c.b16 %v488, %v480
    %v721 = vpack.c.b16 %v489, %v481
    %v722 = vpack.c.b16 %v490, %v482
    %v723 = vpack.c.b16 %v491, %v483
    %v724 = vpack.c.b16 %v500, %v492
    %v725 = vpack.c.b16 %v501, %v493
    %v726 = vpack.c.b16 %v502, %v494
    %v727 = vpack.c.b16 %v503, %v495
    %v728 = vpack.c.b16 %v504, %v496
    %v729 = vpack.c.b16 %v505, %v497
    %v730 = vpack.c.b16 %v506, %v498
    %v731 = vpack.c.b16 %v507, %v499
    %v732 = vpack.c.b16 %v516, %v508
    %v733 = vpack.c.b16 %v517, %v509
    %v734 = vpack.c.b16 %v518, %v510
    %v735 = vpack.c.b16 %v519, %v511
    %v736 = vpack.c.b16 %v520, %v512
    %v737 = vpack.c.b16 %v521, %v513
    %v738 = vpack.c.b16 %v522, %v514
    %v739 = vpack.c.b16 %v523, %v515
    %v740 = vpack.c.b16 %v532, %v524
    %v741 = vpack.c.b16 %v533, %v525
    %v742 = vpack.c.b16 %v534, %v526
    %v743 = vpack.c.b16 %v535, %v527
    %v744 = vpack.c.b16 %v536, %v528
    %v745 = vpack.c.b16 %v537, %v529
    %v746 = vpack.c.b16 %v538, %v530
    %v747 = vpack.c.b16 %v539, %v531
    %v748 = vpack.c.b16 %v548, %v540
    %v749 = vpack.c.b16 %v549, %v541
    %v750 = vpack.c.b16 %v550, %v542
    %v751 = vpack.c.b16 %v551, %v543
    %v752 = vpack.c.b16 %v552, %v544
    %v753 = vpack.c.b16 %v553, %v545
    %v754 = vpack.c.b16 %v554, %v546
    %v755 = vpack.c.b16 %v555, %v547
    %v756 = vpack.c.b16 %v564, %v556
    %v757 = vpack.c.b16 %v565, %v557
    %v758 = vpack.c.b16 %v566, %v558
    %v759 = vpack.c.b16 %v567, %v559
    %v760 = vpack.c.b16 %v568, %v560
    %v761 = vpack.c.b16 %v569, %v561
    %v762 = vpack.c.b16 %v570, %v562
    %v763 = vpack.c.b16 %v571, %v563
    %v764 = vpack.c.b16 %v580, %v572
    %v765 = vpack.c.b16 %v581, %v573
    %v766 = vpack.c.b16 %v582, %v574
    %v767 = vpack.c.b16 %v583, %v575
    %v768 = vpack.c.b16 %v584, %v576
    %v769 = vpack.c.b16 %v585, %v577
    %v770 = vpack.c.b16 %v586, %v578
    %v771 = vpack.c.b16 %v587, %v579
    %v772 = vpack.c.b16 %v596, %v588
    %v773 = vpack.c.b16 %v597, %v589
    %v774 = vpack.c.b16 %v598, %v590
    %v775 = vpack.c.b16 %v599, %v591
    %v776 = vpack.c.b16 %v600, %v592
    %v777 = vpack.c.b16 %v601, %v593
    %v778 = vpack.c.b16 %v602, %v594
    %v779 = vpack.c.b16 %v603, %v595
    %v780 = vpack.c.b16 %v612, %v604
    %v781 = vpack.c.b16 %v613, %v605
    %v782 = vpack.c.b16 %v614, %v606
    %v783 = vpack.c.b16 %v615, %v607
    %v784 = vpack.c.b16 %v616, %v608
    %v785 = vpack.c.b16 %v617, %v609
    %v786 = vpack.c.b16 %v618, %v610
    %v787 = vpack.c.b16 %v619, %v611
    %v788 = vpack.c.b16 %v628, %v620
    %v789 = vpack.c.b16 %v629, %v621
    %v790 = vpack.c.b16 %v630, %v622
    %v791 = vpack.c.b16 %v631, %v623
    %v792 = vpack.c.b16 %v632, %v624
    %v793 = vpack.c.b16 %v633, %v625
    %v794 = vpack.c.b16 %v634, %v626
    %v795 = vpack.c.b16 %v635, %v627
    %v796 = vpack.c.b16 %v644, %v636
    %v797 = vpack.c.b16 %v645, %v637
    %v798 = vpack.c.b16 %v646, %v638
    %v799 = vpack.c.b16 %v647, %v639
    %v800 = vpack.c.b16 %v648, %v640
    %v801 = vpack.c.b16 %v649, %v641
    %v802 = vpack.c.b16 %v650, %v642
    %v803 = vpack.c.b16 %v651, %v643
    %v804 = vpack.c.b16 %v660, %v652
    %v805 = vpack.c.b16 %v661, %v653
    %v806 = vpack.c.b16 %v662, %v654
    %v807 = vpack.c.b16 %v663, %v655
    %v808 = vpack.c.b16 %v664, %v656
    %v809 = vpack.c.b16 %v665, %v657
    %v810 = vpack.c.b16 %v666, %v658
    %v811 = vpack.c.b16 %v667, %v659
    %v812 = vpack.c.b16 %v676, %v668
    %v813 = vpack.c.b16 %v677, %v669
    %v814 = vpack.c.b16 %v678, %v670
    %v815 = vpack.c.b16 %v679, %v671
    %v816 = vpack.c.b16 %v680, %v672
    %v817 = vpack.c.b16 %v681, %v673
    %v818 = vpack.c.b16 %v682, %v674
    %v819 = vpack.c.b16 %v683, %v675
    %v820 = vpack.c.b16 %v692, %v684
    %v821 = vpack.c.b16 %v693, %v685
    %v822 = vpack.c.b16 %v694, %v686
    %v823 = vpack.c.b16 %v695, %v687
    %v824 = vpack.c.b16 %v696, %v688
    %v825 = vpack.c.b16 %v697, %v689
    %v826 = vpack.c.b16 %v698, %v690
    %v827 = vpack.c.b16 %v699, %v691
    %956 = vmatprep.subr.bf16.mxu0 %v701
    %957 = vmatpush1.bf16.msra.mxu0 %v700
    %958 = vmatprep.subr.bf16.mxu0 %v709
    %959 = vmatpush1.bf16.msra.mxu0 %v708
    %960 = vmatprep.subr.bf16.mxu0 %v717
    %961 = vmatpush1.bf16.msra.mxu0 %v716
    %962 = vmatprep.subr.bf16.mxu0 %v725
    %963 = vmatpush1.bf16.msra.mxu0 %v724
    %964 = vmatprep.subr.bf16.mxu0 %v733
    %965 = vmatpush1.bf16.msra.mxu0 %v732
    %966 = vmatprep.subr.bf16.mxu0 %v741
    %967 = vmatpush1.bf16.msra.mxu0 %v740
    %968 = vmatprep.subr.bf16.mxu0 %v749
    %969 = vmatpush1.bf16.msra.mxu0 %v748
    %970 = vmatprep.subr.bf16.mxu0 %v757
    %971 = vmatpush1.bf16.msra.mxu0 %v756
    %972 = vmatprep.subr.bf16.mxu0 %v765
    %973 = vmatpush1.bf16.msra.mxu0 %v764
    %974 = vmatprep.subr.bf16.mxu0 %v773
    %975 = vmatpush1.bf16.msra.mxu0 %v772
    %976 = vmatprep.subr.bf16.mxu0 %v781
    %977 = vmatpush1.bf16.msra.mxu0 %v780
    %978 = vmatprep.subr.bf16.mxu0 %v789
    %979 = vmatpush1.bf16.msra.mxu0 %v788
    %980 = vmatprep.subr.bf16.mxu0 %v797
    %981 = vmatpush1.bf16.msra.mxu0 %v796
    %982 = vmatprep.subr.bf16.mxu0 %v805
    %983 = vmatpush1.bf16.msra.mxu0 %v804
    %984 = vmatprep.subr.bf16.mxu0 %v813
    %985 = vmatpush1.bf16.msra.mxu0 %v812
    %986 = vmatprep.subr.bf16.mxu0 %v821
    %987 = vmatpush1.bf16.msra.mxu0 %v820
    %988 = vmatprep.mubr.bf16.mxu0 %v123
    %989 = vmatmul.mubr.bf16.gmra.mrb[0].mxu0 %v122
    %v990 = vpop.f32.mrb[0].mxu0
    %v991 = vadd.f32 %v279, %v990
    %v992 = vpop.f32.mrb[0].mxu0
    %v993 = vadd.f32 %v283, %v992
    %v994 = vpop.f32.mrb[0].mxu0
    %v995 = vadd.f32 %v279, %v994
    %v996 = vpop.f32.mrb[0].mxu0
    %v997 = vadd.f32 %v283, %v996
    %998 = vmatprep.mubr.bf16.mxu0 %v125
    %999 = vmatmul.mubr.bf16.gmra.mrb[0].mxu0 %v124
    %v1000 = vpop.f32.mrb[0].mxu0
    %v1001 = vadd.f32 %v279, %v1000
    %v1002 = vpop.f32.mrb[0].mxu0
    %v1003 = vadd.f32 %v283, %v1002
    %v1004 = vpop.f32.mrb[0].mxu0
    %v1005 = vadd.f32 %v279, %v1004
    %v1006 = vpop.f32.mrb[0].mxu0
    %v1007 = vadd.f32 %v283, %v1006
    %1008 = vmatprep.mubr.bf16.mxu0 %v127
    %1009 = vmatmul.mubr.bf16.gmra.mrb[0].mxu0 %v126
    %v1010 = vpop.f32.mrb[0].mxu0
    %v1011 = vadd.f32 %v279, %v1010
    %v1012 = vpop.f32.mrb[0].mxu0
    %v1013 = vadd.f32 %v283, %v1012
    %v1014 = vpop.f32.mrb[0].mxu0
    %v1015 = vadd.f32 %v279, %v1014
    %v1016 = vpop.f32.mrb[0].mxu0
    %v1017 = vadd.f32 %v283, %v1016
    %1018 = vmatprep.mubr.bf16.mxu0 %v129
    %1019 = vmatmul.mubr.bf16.gmra.mrb[0].mxu0 %v128
    %v1020 = vpop.f32.mrb[0].mxu0
    %v1021 = vadd.f32 %v279, %v1020
    %v1022 = vpop.f32.mrb[0].mxu0
    %v1023 = vadd.f32 %v283, %v1022
    %v1024 = vpop.f32.mrb[0].mxu0
    %v1025 = vadd.f32 %v279, %v1024
    %v1026 = vpop.f32.mrb[0].mxu0
    %v1027 = vadd.f32 %v283, %v1026
    %1028 = vmatprep.mubr.bf16.mxu0 %v131
    %1029 = vmatmul.mubr.bf16.gmra.mrb[0].mxu0 %v130
    %v1030 = vpop.f32.mrb[0].mxu0
    %v1031 = vadd.f32 %v279, %v1030
    %v1032 = vpop.f32.mrb[0].mxu0
    %v1033 = vadd.f32 %v283, %v1032
    %v1034 = vpop.f32.mrb[0].mxu0
    %v1035 = vadd.f32 %v279, %v1034
    %v1036 = vpop.f32.mrb[0].mxu0
    %v1037 = vadd.f32 %v283, %v1036
    %1038 = vmatprep.mubr.bf16.mxu0 %v133
    %1039 = vmatmul.mubr.bf16.gmra.mrb[0].mxu0 %v132
    %v1040 = vpop.f32.mrb[0].mxu0
    %v1041 = vadd.f32 %v279, %v1040
    %v1042 = vpop.f32.mrb[0].mxu0
    %v1043 = vadd.f32 %v283, %v1042
    %v1044 = vpop.f32.mrb[0].mxu0
    %v1045 = vadd.f32 %v279, %v1044
    %v1046 = vpop.f32.mrb[0].mxu0
    %v1047 = vadd.f32 %v283, %v1046
    %1048 = vmatprep.mubr.bf16.mxu0 %v135
    %1049 = vmatmul.mubr.bf16.gmra.mrb[0].mxu0 %v134
    %v1050 = vpop.f32.mrb[0].mxu0
    %v1051 = vadd.f32 %v279, %v1050
    %v1052 = vpop.f32.mrb[0].mxu0
    %v1053 = vadd.f32 %v283, %v1052
    %v1054 = vpop.f32.mrb[0].mxu0
    %v1055 = vadd.f32 %v279, %v1054
    %v1056 = vpop.f32.mrb[0].mxu0
    %v1057 = vadd.f32 %v283, %v1056
    %1058 = vmatprep.mubr.bf16.mxu0 %v137
    %1059 = vmatmul.mubr.bf16.gmra.mrb[0].mxu0 %v136
    %v1060 = vpop.f32.mrb[0].mxu0
    %v1061 = vadd.f32 %v279, %v1060
    %v1062 = vpop.f32.mrb[0].mxu0
    %v1063 = vadd.f32 %v283, %v1062
    %v1064 = vpop.f32.mrb[0].mxu0
    %v1065 = vadd.f32 %v279, %v1064
    %v1066 = vpop.f32.mrb[0].mxu0
    %v1067 = vadd.f32 %v283, %v1066
    %1068 = vmatprep.mubr.bf16.mxu0 %v139
    %1069 = vmatmul.mubr.bf16.gmra.mrb[0].mxu0 %v138
    %v1070 = vpop.f32.mrb[0].mxu0
    %v1071 = vadd.f32 %v279, %v1070
    %v1072 = vpop.f32.mrb[0].mxu0
    %v1073 = vadd.f32 %v283, %v1072
    %v1074 = vpop.f32.mrb[0].mxu0
    %v1075 = vadd.f32 %v279, %v1074
    %v1076 = vpop.f32.mrb[0].mxu0
    %v1077 = vadd.f32 %v283, %v1076
    %1078 = vmatprep.mubr.bf16.mxu0 %v141
    %1079 = vmatmul.mubr.bf16.gmra.mrb[0].mxu0 %v140
    %v1080 = vpop.f32.mrb[0].mxu0
    %v1081 = vadd.f32 %v279, %v1080
    %v1082 = vpop.f32.mrb[0].mxu0
    %v1083 = vadd.f32 %v283, %v1082
    %v1084 = vpop.f32.mrb[0].mxu0
    %v1085 = vadd.f32 %v279, %v1084
    %v1086 = vpop.f32.mrb[0].mxu0
    %v1087 = vadd.f32 %v283, %v1086
    %1088 = vmatprep.mubr.bf16.mxu0 %v143
    %1089 = vmatmul.mubr.bf16.gmra.mrb[0].mxu0 %v142
    %v1090 = vpop.f32.mrb[0].mxu0
    %v1091 = vadd.f32 %v279, %v1090
    %v1092 = vpop.f32.mrb[0].mxu0
    %v1093 = vadd.f32 %v283, %v1092
    %v1094 = vpop.f32.mrb[0].mxu0
    %v1095 = vadd.f32 %v279, %v1094
    %v1096 = vpop.f32.mrb[0].mxu0
    %v1097 = vadd.f32 %v283, %v1096
    %1098 = vmatprep.mubr.bf16.mxu0 %v145
    %1099 = vmatmul.mubr.bf16.gmra.mrb[0].mxu0 %v144
    %v1100 = vpop.f32.mrb[0].mxu0
    %v1101 = vadd.f32 %v279, %v1100
    %v1102 = vpop.f32.mrb[0].mxu0
    %v1103 = vadd.f32 %v283, %v1102
    %v1104 = vpop.f32.mrb[0].mxu0
    %v1105 = vadd.f32 %v279, %v1104
    %v1106 = vpop.f32.mrb[0].mxu0
    %v1107 = vadd.f32 %v283, %v1106
    %1108 = vdwg.mxu0
    %1109 = vmatprep.subr.bf16.mxu0 %v703
    %1110 = vmatpush1.bf16.msra.mxu0 %v702
    %1111 = vmatprep.subr.bf16.mxu0 %v711
    %1112 = vmatpush1.bf16.msra.mxu0 %v710
    %1113 = vmatprep.subr.bf16.mxu0 %v719
    %1114 = vmatpush1.bf16.msra.mxu0 %v718
    %1115 = vmatprep.subr.bf16.mxu0 %v727
    %1116 = vmatpush1.bf16.msra.mxu0 %v726
    %1117 = vmatprep.subr.bf16.mxu0 %v735
    %1118 = vmatpush1.bf16.msra.mxu0 %v734
    %1119 = vmatprep.subr.bf16.mxu0 %v743
    %1120 = vmatpush1.bf16.msra.mxu0 %v742
    %1121 = vmatprep.subr.bf16.mxu0 %v751
    %1122 = vmatpush1.bf16.msra.mxu0 %v750
    %1123 = vmatprep.subr.bf16.mxu0 %v759
    %1124 = vmatpush1.bf16.msra.mxu0 %v758
    %1125 = vmatprep.subr.bf16.mxu0 %v767
    %1126 = vmatpush1.bf16.msra.mxu0 %v766
    %1127 = vmatprep.subr.bf16.mxu0 %v775
    %1128 = vmatpush1.bf16.msra.mxu0 %v774
    %1129 = vmatprep.subr.bf16.mxu0 %v783
    %1130 = vmatpush1.bf16.msra.mxu0 %v782
    %1131 = vmatprep.subr.bf16.mxu0 %v791
    %1132 = vmatpush1.bf16.msra.mxu0 %v790
    %1133 = vmatprep.subr.bf16.mxu0 %v799
    %1134 = vmatpush1.bf16.msra.mxu0 %v798
    %1135 = vmatprep.subr.bf16.mxu0 %v807
    %1136 = vmatpush1.bf16.msra.mxu0 %v806
    %1137 = vmatprep.subr.bf16.mxu0 %v815
    %1138 = vmatpush1.bf16.msra.mxu0 %v814
    %1139 = vmatprep.subr.bf16.mxu0 %v823
    %1140 = vmatpush1.bf16.msra.mxu0 %v822
    %1141 = vmatprep.mubr.bf16.mxu0 %v123
    %1142 = vmatmul.mubr.bf16.gmra.mrb[0].mxu0 %v122
    %v1143 = vpop.f32.mrb[0].mxu0
    %v1144 = vadd.f32 %v287, %v1143
    %v1145 = vpop.f32.mrb[0].mxu0
    %v1146 = vadd.f32 %v291, %v1145
    %v1147 = vpop.f32.mrb[0].mxu0
    %v1148 = vadd.f32 %v287, %v1147
    %v1149 = vpop.f32.mrb[0].mxu0
    %v1150 = vadd.f32 %v291, %v1149
    %1151 = vmatprep.mubr.bf16.mxu0 %v125
    %1152 = vmatmul.mubr.bf16.gmra.mrb[0].mxu0 %v124
    %v1153 = vpop.f32.mrb[0].mxu0
    %v1154 = vadd.f32 %v287, %v1153
    %v1155 = vpop.f32.mrb[0].mxu0
    %v1156 = vadd.f32 %v291, %v1155
    %v1157 = vpop.f32.mrb[0].mxu0
    %v1158 = vadd.f32 %v287, %v1157
    %v1159 = vpop.f32.mrb[0].mxu0
    %v1160 = vadd.f32 %v291, %v1159
    %1161 = vmatprep.mubr.bf16.mxu0 %v127
    %1162 = vmatmul.mubr.bf16.gmra.mrb[0].mxu0 %v126
    %v1163 = vpop.f32.mrb[0].mxu0
    %v1164 = vadd.f32 %v287, %v1163
    %v1165 = vpop.f32.mrb[0].mxu0
    %v1166 = vadd.f32 %v291, %v1165
    %v1167 = vpop.f32.mrb[0].mxu0
    %v1168 = vadd.f32 %v287, %v1167
    %v1169 = vpop.f32.mrb[0].mxu0
    %v1170 = vadd.f32 %v291, %v1169
    %1171 = vmatprep.mubr.bf16.mxu0 %v129
    %1172 = vmatmul.mubr.bf16.gmra.mrb[0].mxu0 %v128
    %v1173 = vpop.f32.mrb[0].mxu0
    %v1174 = vadd.f32 %v287, %v1173
    %v1175 = vpop.f32.mrb[0].mxu0
    %v1176 = vadd.f32 %v291, %v1175
    %v1177 = vpop.f32.mrb[0].mxu0
    %v1178 = vadd.f32 %v287, %v1177
    %v1179 = vpop.f32.mrb[0].mxu0
    %v1180 = vadd.f32 %v291, %v1179
    %1181 = vmatprep.mubr.bf16.mxu0 %v131
    %1182 = vmatmul.mubr.bf16.gmra.mrb[0].mxu0 %v130
    %v1183 = vpop.f32.mrb[0].mxu0
    %v1184 = vadd.f32 %v287, %v1183
    %v1185 = vpop.f32.mrb[0].mxu0
    %v1186 = vadd.f32 %v291, %v1185
    %v1187 = vpop.f32.mrb[0].mxu0
    %v1188 = vadd.f32 %v287, %v1187
    %v1189 = vpop.f32.mrb[0].mxu0
    %v1190 = vadd.f32 %v291, %v1189
    %1191 = vmatprep.mubr.bf16.mxu0 %v133
    %1192 = vmatmul.mubr.bf16.gmra.mrb[0].mxu0 %v132
    %v1193 = vpop.f32.mrb[0].mxu0
    %v1194 = vadd.f32 %v287, %v1193
    %v1195 = vpop.f32.mrb[0].mxu0
    %v1196 = vadd.f32 %v291, %v1195
    %v1197 = vpop.f32.mrb[0].mxu0
    %v1198 = vadd.f32 %v287, %v1197
    %v1199 = vpop.f32.mrb[0].mxu0
    %v1200 = vadd.f32 %v291, %v1199
    %1201 = vmatprep.mubr.bf16.mxu0 %v135
    %1202 = vmatmul.mubr.bf16.gmra.mrb[0].mxu0 %v134
    %v1203 = vpop.f32.mrb[0].mxu0
    %v1204 = vadd.f32 %v287, %v1203
    %v1205 = vpop.f32.mrb[0].mxu0
    %v1206 = vadd.f32 %v291, %v1205
    %v1207 = vpop.f32.mrb[0].mxu0
    %v1208 = vadd.f32 %v287, %v1207
    %v1209 = vpop.f32.mrb[0].mxu0
    %v1210 = vadd.f32 %v291, %v1209
    %1211 = vmatprep.mubr.bf16.mxu0 %v137
    %1212 = vmatmul.mubr.bf16.gmra.mrb[0].mxu0 %v136
    %v1213 = vpop.f32.mrb[0].mxu0
    %v1214 = vadd.f32 %v287, %v1213
    %v1215 = vpop.f32.mrb[0].mxu0
    %v1216 = vadd.f32 %v291, %v1215
    %v1217 = vpop.f32.mrb[0].mxu0
    %v1218 = vadd.f32 %v287, %v1217
    %v1219 = vpop.f32.mrb[0].mxu0
    %v1220 = vadd.f32 %v291, %v1219
    %1221 = vmatprep.mubr.bf16.mxu0 %v139
    %1222 = vmatmul.mubr.bf16.gmra.mrb[0].mxu0 %v138
    %v1223 = vpop.f32.mrb[0].mxu0
    %v1224 = vadd.f32 %v287, %v1223
    %v1225 = vpop.f32.mrb[0].mxu0
    %v1226 = vadd.f32 %v291, %v1225
    %v1227 = vpop.f32.mrb[0].mxu0
    %v1228 = vadd.f32 %v287, %v1227
    %v1229 = vpop.f32.mrb[0].mxu0
    %v1230 = vadd.f32 %v291, %v1229
    %1231 = vmatprep.mubr.bf16.mxu0 %v141
    %1232 = vmatmul.mubr.bf16.gmra.mrb[0].mxu0 %v140
    %v1233 = vpop.f32.mrb[0].mxu0
    %v1234 = vadd.f32 %v287, %v1233
    %v1235 = vpop.f32.mrb[0].mxu0
    %v1236 = vadd.f32 %v291, %v1235
    %v1237 = vpop.f32.mrb[0].mxu0
    %v1238 = vadd.f32 %v287, %v1237
    %v1239 = vpop.f32.mrb[0].mxu0
    %v1240 = vadd.f32 %v291, %v1239
    %1241 = vmatprep.mubr.bf16.mxu0 %v143
    %1242 = vmatmul.mubr.bf16.gmra.mrb[0].mxu0 %v142
    %v1243 = vpop.f32.mrb[0].mxu0
    %v1244 = vadd.f32 %v287, %v1243
    %v1245 = vpop.f32.mrb[0].mxu0
    %v1246 = vadd.f32 %v291, %v1245
    %v1247 = vpop.f32.mrb[0].mxu0
    %v1248 = vadd.f32 %v287, %v1247
    %v1249 = vpop.f32.mrb[0].mxu0
    %v1250 = vadd.f32 %v291, %v1249
    %1251 = vmatprep.mubr.bf16.mxu0 %v145
    %1252 = vmatmul.mubr.bf16.gmra.mrb[0].mxu0 %v144
    %v1253 = vpop.f32.mrb[0].mxu0
    %v1254 = vadd.f32 %v287, %v1253
    %v1255 = vpop.f32.mrb[0].mxu0
    %v1256 = vadd.f32 %v291, %v1255
    %v1257 = vpop.f32.mrb[0].mxu0
    %v1258 = vadd.f32 %v287, %v1257
    %v1259 = vpop.f32.mrb[0].mxu0
    %v1260 = vadd.f32 %v291, %v1259
    %1261 = vdwg.mxu0
    %1262 = vmatprep.subr.bf16.mxu0 %v705
    %1263 = vmatpush1.bf16.msra.mxu0 %v704
    %1264 = vmatprep.subr.bf16.mxu0 %v713
    %1265 = vmatpush1.bf16.msra.mxu0 %v712
    %1266 = vmatprep.subr.bf16.mxu0 %v721
    %1267 = vmatpush1.bf16.msra.mxu0 %v720
    %1268 = vmatprep.subr.bf16.mxu0 %v729
    %1269 = vmatpush1.bf16.msra.mxu0 %v728
    %1270 = vmatprep.subr.bf16.mxu0 %v737
    %1271 = vmatpush1.bf16.msra.mxu0 %v736
    %1272 = vmatprep.subr.bf16.mxu0 %v745
    %1273 = vmatpush1.bf16.msra.mxu0 %v744
    %1274 = vmatprep.subr.bf16.mxu0 %v753
    %1275 = vmatpush1.bf16.msra.mxu0 %v752
    %1276 = vmatprep.subr.bf16.mxu0 %v761
    %1277 = vmatpush1.bf16.msra.mxu0 %v760
    %1278 = vmatprep.subr.bf16.mxu0 %v769
    %1279 = vmatpush1.bf16.msra.mxu0 %v768
    %1280 = vmatprep.subr.bf16.mxu0 %v777
    %1281 = vmatpush1.bf16.msra.mxu0 %v776
    %1282 = vmatprep.subr.bf16.mxu0 %v785
    %1283 = vmatpush1.bf16.msra.mxu0 %v784
    %1284 = vmatprep.subr.bf16.mxu0 %v793
    %1285 = vmatpush1.bf16.msra.mxu0 %v792
    %1286 = vmatprep.subr.bf16.mxu0 %v801
    %1287 = vmatpush1.bf16.msra.mxu0 %v800
    %1288 = vmatprep.subr.bf16.mxu0 %v809
    %1289 = vmatpush1.bf16.msra.mxu0 %v808
    %1290 = vmatprep.subr.bf16.mxu0 %v817
    %1291 = vmatpush1.bf16.msra.mxu0 %v816
    %1292 = vmatprep.subr.bf16.mxu0 %v825
    %1293 = vmatpush1.bf16.msra.mxu0 %v824
    %1294 = vmatprep.mubr.bf16.mxu0 %v123
    %1295 = vmatmul.mubr.bf16.gmra.mrb[0].mxu0 %v122
    %v1296 = vpop.f32.mrb[0].mxu0
    %v1297 = vadd.f32 %v295, %v1296
    %v1298 = vpop.f32.mrb[0].mxu0
    %v1299 = vadd.f32 %v299, %v1298
    %v1300 = vpop.f32.mrb[0].mxu0
    %v1301 = vadd.f32 %v295, %v1300
    %v1302 = vpop.f32.mrb[0].mxu0
    %v1303 = vadd.f32 %v299, %v1302
    %1304 = vmatprep.mubr.bf16.mxu0 %v125
    %1305 = vmatmul.mubr.bf16.gmra.mrb[0].mxu0 %v124
    %v1306 = vpop.f32.mrb[0].mxu0
    %v1307 = vadd.f32 %v295, %v1306
    %v1308 = vpop.f32.mrb[0].mxu0
    %v1309 = vadd.f32 %v299, %v1308
    %v1310 = vpop.f32.mrb[0].mxu0
    %v1311 = vadd.f32 %v295, %v1310
    %v1312 = vpop.f32.mrb[0].mxu0
    %v1313 = vadd.f32 %v299, %v1312
    %1314 = vmatprep.mubr.bf16.mxu0 %v127
    %1315 = vmatmul.mubr.bf16.gmra.mrb[0].mxu0 %v126
    %v1316 = vpop.f32.mrb[0].mxu0
    %v1317 = vadd.f32 %v295, %v1316
    %v1318 = vpop.f32.mrb[0].mxu0
    %v1319 = vadd.f32 %v299, %v1318
    %v1320 = vpop.f32.mrb[0].mxu0
    %v1321 = vadd.f32 %v295, %v1320
    %v1322 = vpop.f32.mrb[0].mxu0
    %v1323 = vadd.f32 %v299, %v1322
    %1324 = vmatprep.mubr.bf16.mxu0 %v129
    %1325 = vmatmul.mubr.bf16.gmra.mrb[0].mxu0 %v128
    %v1326 = vpop.f32.mrb[0].mxu0
    %v1327 = vadd.f32 %v295, %v1326
    %v1328 = vpop.f32.mrb[0].mxu0
    %v1329 = vadd.f32 %v299, %v1328
    %v1330 = vpop.f32.mrb[0].mxu0
    %v1331 = vadd.f32 %v295, %v1330
    %v1332 = vpop.f32.mrb[0].mxu0
    %v1333 = vadd.f32 %v299, %v1332
    %1334 = vmatprep.mubr.bf16.mxu0 %v131
    %1335 = vmatmul.mubr.bf16.gmra.mrb[0].mxu0 %v130
    %v1336 = vpop.f32.mrb[0].mxu0
    %v1337 = vadd.f32 %v295, %v1336
    %v1338 = vpop.f32.mrb[0].mxu0
    %v1339 = vadd.f32 %v299, %v1338
    %v1340 = vpop.f32.mrb[0].mxu0
    %v1341 = vadd.f32 %v295, %v1340
    %v1342 = vpop.f32.mrb[0].mxu0
    %v1343 = vadd.f32 %v299, %v1342
    %1344 = vmatprep.mubr.bf16.mxu0 %v133
    %1345 = vmatmul.mubr.bf16.gmra.mrb[0].mxu0 %v132
    %v1346 = vpop.f32.mrb[0].mxu0
    %v1347 = vadd.f32 %v295, %v1346
    %v1348 = vpop.f32.mrb[0].mxu0
    %v1349 = vadd.f32 %v299, %v1348
    %v1350 = vpop.f32.mrb[0].mxu0
    %v1351 = vadd.f32 %v295, %v1350
    %v1352 = vpop.f32.mrb[0].mxu0
    %v1353 = vadd.f32 %v299, %v1352
    %1354 = vmatprep.mubr.bf16.mxu0 %v135
    %1355 = vmatmul.mubr.bf16.gmra.mrb[0].mxu0 %v134
    %v1356 = vpop.f32.mrb[0].mxu0
    %v1357 = vadd.f32 %v295, %v1356
    %v1358 = vpop.f32.mrb[0].mxu0
    %v1359 = vadd.f32 %v299, %v1358
    %v1360 = vpop.f32.mrb[0].mxu0
    %v1361 = vadd.f32 %v295, %v1360
    %v1362 = vpop.f32.mrb[0].mxu0
    %v1363 = vadd.f32 %v299, %v1362
    %1364 = vmatprep.mubr.bf16.mxu0 %v137
    %1365 = vmatmul.mubr.bf16.gmra.mrb[0].mxu0 %v136
    %v1366 = vpop.f32.mrb[0].mxu0
    %v1367 = vadd.f32 %v295, %v1366
    %v1368 = vpop.f32.mrb[0].mxu0
    %v1369 = vadd.f32 %v299, %v1368
    %v1370 = vpop.f32.mrb[0].mxu0
    %v1371 = vadd.f32 %v295, %v1370
    %v1372 = vpop.f32.mrb[0].mxu0
    %v1373 = vadd.f32 %v299, %v1372
    %1374 = vmatprep.mubr.bf16.mxu0 %v139
    %1375 = vmatmul.mubr.bf16.gmra.mrb[0].mxu0 %v138
    %v1376 = vpop.f32.mrb[0].mxu0
    %v1377 = vadd.f32 %v295, %v1376
    %v1378 = vpop.f32.mrb[0].mxu0
    %v1379 = vadd.f32 %v299, %v1378
    %v1380 = vpop.f32.mrb[0].mxu0
    %v1381 = vadd.f32 %v295, %v1380
    %v1382 = vpop.f32.mrb[0].mxu0
    %v1383 = vadd.f32 %v299, %v1382
    %1384 = vmatprep.mubr.bf16.mxu0 %v141
    %1385 = vmatmul.mubr.bf16.gmra.mrb[0].mxu0 %v140
    %v1386 = vpop.f32.mrb[0].mxu0
    %v1387 = vadd.f32 %v295, %v1386
    %v1388 = vpop.f32.mrb[0].mxu0
    %v1389 = vadd.f32 %v299, %v1388
    %v1390 = vpop.f32.mrb[0].mxu0
    %v1391 = vadd.f32 %v295, %v1390
    %v1392 = vpop.f32.mrb[0].mxu0
    %v1393 = vadd.f32 %v299, %v1392
    %1394 = vmatprep.mubr.bf16.mxu0 %v143
    %1395 = vmatmul.mubr.bf16.gmra.mrb[0].mxu0 %v142
    %v1396 = vpop.f32.mrb[0].mxu0
    %v1397 = vadd.f32 %v295, %v1396
    %v1398 = vpop.f32.mrb[0].mxu0
    %v1399 = vadd.f32 %v299, %v1398
    %v1400 = vpop.f32.mrb[0].mxu0
    %v1401 = vadd.f32 %v295, %v1400
    %v1402 = vpop.f32.mrb[0].mxu0
    %v1403 = vadd.f32 %v299, %v1402
    %1404 = vmatprep.mubr.bf16.mxu0 %v145
    %1405 = vmatmul.mubr.bf16.gmra.mrb[0].mxu0 %v144
    %v1406 = vpop.f32.mrb[0].mxu0
    %v1407 = vadd.f32 %v295, %v1406
    %v1408 = vpop.f32.mrb[0].mxu0
    %v1409 = vadd.f32 %v299, %v1408
    %v1410 = vpop.f32.mrb[0].mxu0
    %v1411 = vadd.f32 %v295, %v1410
    %v1412 = vpop.f32.mrb[0].mxu0
    %v1413 = vadd.f32 %v299, %v1412
    %1414 = vdwg.mxu0
    %1415 = vmatprep.subr.bf16.mxu0 %v707
    %1416 = vmatpush1.bf16.msra.mxu0 %v706
    %1417 = vmatprep.subr.bf16.mxu0 %v715
    %1418 = vmatpush1.bf16.msra.mxu0 %v714
    %1419 = vmatprep.subr.bf16.mxu0 %v723
    %1420 = vmatpush1.bf16.msra.mxu0 %v722
    %1421 = vmatprep.subr.bf16.mxu0 %v731
    %1422 = vmatpush1.bf16.msra.mxu0 %v730
    %1423 = vmatprep.subr.bf16.mxu0 %v739
    %1424 = vmatpush1.bf16.msra.mxu0 %v738
    %1425 = vmatprep.subr.bf16.mxu0 %v747
    %1426 = vmatpush1.bf16.msra.mxu0 %v746
    %1427 = vmatprep.subr.bf16.mxu0 %v755
    %1428 = vmatpush1.bf16.msra.mxu0 %v754
    %1429 = vmatprep.subr.bf16.mxu0 %v763
    %1430 = vmatpush1.bf16.msra.mxu0 %v762
    %1431 = vmatprep.subr.bf16.mxu0 %v771
    %1432 = vmatpush1.bf16.msra.mxu0 %v770
    %1433 = vmatprep.subr.bf16.mxu0 %v779
    %1434 = vmatpush1.bf16.msra.mxu0 %v778
    %1435 = vmatprep.subr.bf16.mxu0 %v787
    %1436 = vmatpush1.bf16.msra.mxu0 %v786
    %1437 = vmatprep.subr.bf16.mxu0 %v795
    %1438 = vmatpush1.bf16.msra.mxu0 %v794
    %1439 = vmatprep.subr.bf16.mxu0 %v803
    %1440 = vmatpush1.bf16.msra.mxu0 %v802
    %1441 = vmatprep.subr.bf16.mxu0 %v811
    %1442 = vmatpush1.bf16.msra.mxu0 %v810
    %1443 = vmatprep.subr.bf16.mxu0 %v819
    %1444 = vmatpush1.bf16.msra.mxu0 %v818
    %1445 = vmatprep.subr.bf16.mxu0 %v827
    %1446 = vmatpush1.bf16.msra.mxu0 %v826
    %1447 = vmatprep.mubr.bf16.mxu0 %v123
    %1448 = vmatmul.mubr.bf16.gmra.mrb[0].mxu0 %v122
    %v1449 = vpop.f32.mrb[0].mxu0
    %v1450 = vadd.f32 %v303, %v1449
    %v1451 = vpop.f32.mrb[0].mxu0
    %v1452 = vadd.f32 %v307, %v1451
    %v1453 = vpop.f32.mrb[0].mxu0
    %v1454 = vadd.f32 %v303, %v1453
    %v1455 = vpop.f32.mrb[0].mxu0
    %v1456 = vadd.f32 %v307, %v1455
    %1457 = vmatprep.mubr.bf16.mxu0 %v125
    %1458 = vmatmul.mubr.bf16.gmra.mrb[0].mxu0 %v124
    %v1459 = vpop.f32.mrb[0].mxu0
    %v1460 = vadd.f32 %v303, %v1459
    %v1461 = vpop.f32.mrb[0].mxu0
    %v1462 = vadd.f32 %v307, %v1461
    %v1463 = vpop.f32.mrb[0].mxu0
    %v1464 = vadd.f32 %v303, %v1463
    %v1465 = vpop.f32.mrb[0].mxu0
    %v1466 = vadd.f32 %v307, %v1465
    %1467 = vmatprep.mubr.bf16.mxu0 %v127
    %1468 = vmatmul.mubr.bf16.gmra.mrb[0].mxu0 %v126
    %v1469 = vpop.f32.mrb[0].mxu0
    %v1470 = vadd.f32 %v303, %v1469
    %v1471 = vpop.f32.mrb[0].mxu0
    %v1472 = vadd.f32 %v307, %v1471
    %v1473 = vpop.f32.mrb[0].mxu0
    %v1474 = vadd.f32 %v303, %v1473
    %v1475 = vpop.f32.mrb[0].mxu0
    %v1476 = vadd.f32 %v307, %v1475
    %1477 = vmatprep.mubr.bf16.mxu0 %v129
    %1478 = vmatmul.mubr.bf16.gmra.mrb[0].mxu0 %v128
    %v1479 = vpop.f32.mrb[0].mxu0
    %v1480 = vadd.f32 %v303, %v1479
    %v1481 = vpop.f32.mrb[0].mxu0
    %v1482 = vadd.f32 %v307, %v1481
    %v1483 = vpop.f32.mrb[0].mxu0
    %v1484 = vadd.f32 %v303, %v1483
    %v1485 = vpop.f32.mrb[0].mxu0
    %v1486 = vadd.f32 %v307, %v1485
    %1487 = vmatprep.mubr.bf16.mxu0 %v131
    %1488 = vmatmul.mubr.bf16.gmra.mrb[0].mxu0 %v130
    %v1489 = vpop.f32.mrb[0].mxu0
    %v1490 = vadd.f32 %v303, %v1489
    %v1491 = vpop.f32.mrb[0].mxu0
    %v1492 = vadd.f32 %v307, %v1491
    %v1493 = vpop.f32.mrb[0].mxu0
    %v1494 = vadd.f32 %v303, %v1493
    %v1495 = vpop.f32.mrb[0].mxu0
    %v1496 = vadd.f32 %v307, %v1495
    %1497 = vmatprep.mubr.bf16.mxu0 %v133
    %1498 = vmatmul.mubr.bf16.gmra.mrb[0].mxu0 %v132
    %v1499 = vpop.f32.mrb[0].mxu0
    %v1500 = vadd.f32 %v303, %v1499
    %v1501 = vpop.f32.mrb[0].mxu0
    %v1502 = vadd.f32 %v307, %v1501
    %v1503 = vpop.f32.mrb[0].mxu0
    %v1504 = vadd.f32 %v303, %v1503
    %v1505 = vpop.f32.mrb[0].mxu0
    %v1506 = vadd.f32 %v307, %v1505
    %1507 = vmatprep.mubr.bf16.mxu0 %v135
    %1508 = vmatmul.mubr.bf16.gmra.mrb[0].mxu0 %v134
    %v1509 = vpop.f32.mrb[0].mxu0
    %v1510 = vadd.f32 %v303, %v1509
    %v1511 = vpop.f32.mrb[0].mxu0
    %v1512 = vadd.f32 %v307, %v1511
    %v1513 = vpop.f32.mrb[0].mxu0
    %v1514 = vadd.f32 %v303, %v1513
    %v1515 = vpop.f32.mrb[0].mxu0
    %v1516 = vadd.f32 %v307, %v1515
    %1517 = vmatprep.mubr.bf16.mxu0 %v137
    %1518 = vmatmul.mubr.bf16.gmra.mrb[0].mxu0 %v136
    %v1519 = vpop.f32.mrb[0].mxu0
    %v1520 = vadd.f32 %v303, %v1519
    %v1521 = vpop.f32.mrb[0].mxu0
    %v1522 = vadd.f32 %v307, %v1521
    %v1523 = vpop.f32.mrb[0].mxu0
    %v1524 = vadd.f32 %v303, %v1523
    %v1525 = vpop.f32.mrb[0].mxu0
    %v1526 = vadd.f32 %v307, %v1525
    %1527 = vmatprep.mubr.bf16.mxu0 %v139
    %1528 = vmatmul.mubr.bf16.gmra.mrb[0].mxu0 %v138
    %v1529 = vpop.f32.mrb[0].mxu0
    %v1530 = vadd.f32 %v303, %v1529
    %v1531 = vpop.f32.mrb[0].mxu0
    %v1532 = vadd.f32 %v307, %v1531
    %v1533 = vpop.f32.mrb[0].mxu0
    %v1534 = vadd.f32 %v303, %v1533
    %v1535 = vpop.f32.mrb[0].mxu0
    %v1536 = vadd.f32 %v307, %v1535
    %1537 = vmatprep.mubr.bf16.mxu0 %v141
    %1538 = vmatmul.mubr.bf16.gmra.mrb[0].mxu0 %v140
    %v1539 = vpop.f32.mrb[0].mxu0
    %v1540 = vadd.f32 %v303, %v1539
    %v1541 = vpop.f32.mrb[0].mxu0
    %v1542 = vadd.f32 %v307, %v1541
    %v1543 = vpop.f32.mrb[0].mxu0
    %v1544 = vadd.f32 %v303, %v1543
    %v1545 = vpop.f32.mrb[0].mxu0
    %v1546 = vadd.f32 %v307, %v1545
    %1547 = vmatprep.mubr.bf16.mxu0 %v143
    %1548 = vmatmul.mubr.bf16.gmra.mrb[0].mxu0 %v142
    %v1549 = vpop.f32.mrb[0].mxu0
    %v1550 = vadd.f32 %v303, %v1549
    %v1551 = vpop.f32.mrb[0].mxu0
    %v1552 = vadd.f32 %v307, %v1551
    %v1553 = vpop.f32.mrb[0].mxu0
    %v1554 = vadd.f32 %v303, %v1553
    %v1555 = vpop.f32.mrb[0].mxu0
    %v1556 = vadd.f32 %v307, %v1555
    %1557 = vmatprep.mubr.bf16.mxu0 %v145
    %1558 = vmatmul.mubr.bf16.gmra.mrb[0].mxu0 %v144
    %v1559 = vpop.f32.mrb[0].mxu0
    %v1560 = vadd.f32 %v303, %v1559
    %v1561 = vpop.f32.mrb[0].mxu0
    %v1562 = vadd.f32 %v307, %v1561
    %v1563 = vpop.f32.mrb[0].mxu0
    %v1564 = vadd.f32 %v303, %v1563
    %v1565 = vpop.f32.mrb[0].mxu0
    %v1566 = vadd.f32 %v307, %v1565
    %1567 = vdwg.mxu0
    %v1568 = vmax.f32 %v991, 0.0
    %v1569 = vmax.f32 %v993, 0.0
    %v1570 = vmax.f32 %v1144, 0.0
    %v1571 = vmax.f32 %v1146, 0.0
    %v1572 = vmax.f32 %v1297, 0.0
    %v1573 = vmax.f32 %v1299, 0.0
    %v1574 = vmax.f32 %v1450, 0.0
    %v1575 = vmax.f32 %v1452, 0.0
    %v1576 = vmax.f32 %v995, 0.0
    %v1577 = vmax.f32 %v997, 0.0
    %v1578 = vmax.f32 %v1148, 0.0
    %v1579 = vmax.f32 %v1150, 0.0
    %v1580 = vmax.f32 %v1301, 0.0
    %v1581 = vmax.f32 %v1303, 0.0
    %v1582 = vmax.f32 %v1454, 0.0
    %v1583 = vmax.f32 %v1456, 0.0
    %v1584 = vmax.f32 %v1001, 0.0
    %v1585 = vmax.f32 %v1003, 0.0
    %v1586 = vmax.f32 %v1154, 0.0
    %v1587 = vmax.f32 %v1156, 0.0
    %v1588 = vmax.f32 %v1307, 0.0
    %v1589 = vmax.f32 %v1309, 0.0
    %v1590 = vmax.f32 %v1460, 0.0
    %v1591 = vmax.f32 %v1462, 0.0
    %v1592 = vmax.f32 %v1005, 0.0
    %v1593 = vmax.f32 %v1007, 0.0
    %v1594 = vmax.f32 %v1158, 0.0
    %v1595 = vmax.f32 %v1160, 0.0
    %v1596 = vmax.f32 %v1311, 0.0
    %v1597 = vmax.f32 %v1313, 0.0
    %v1598 = vmax.f32 %v1464, 0.0
    %v1599 = vmax.f32 %v1466, 0.0
    %v1600 = vmax.f32 %v1011, 0.0
    %v1601 = vmax.f32 %v1013, 0.0
    %v1602 = vmax.f32 %v1164, 0.0
    %v1603 = vmax.f32 %v1166, 0.0
    %v1604 = vmax.f32 %v1317, 0.0
    %v1605 = vmax.f32 %v1319, 0.0
    %v1606 = vmax.f32 %v1470, 0.0
    %v1607 = vmax.f32 %v1472, 0.0
    %v1608 = vmax.f32 %v1015, 0.0
    %v1609 = vmax.f32 %v1017, 0.0
    %v1610 = vmax.f32 %v1168, 0.0
    %v1611 = vmax.f32 %v1170, 0.0
    %v1612 = vmax.f32 %v1321, 0.0
    %v1613 = vmax.f32 %v1323, 0.0
    %v1614 = vmax.f32 %v1474, 0.0
    %v1615 = vmax.f32 %v1476, 0.0
    %v1616 = vmax.f32 %v1021, 0.0
    %v1617 = vmax.f32 %v1023, 0.0
    %v1618 = vmax.f32 %v1174, 0.0
    %v1619 = vmax.f32 %v1176, 0.0
    %v1620 = vmax.f32 %v1327, 0.0
    %v1621 = vmax.f32 %v1329, 0.0
    %v1622 = vmax.f32 %v1480, 0.0
    %v1623 = vmax.f32 %v1482, 0.0
    %v1624 = vmax.f32 %v1025, 0.0
    %v1625 = vmax.f32 %v1027, 0.0
    %v1626 = vmax.f32 %v1178, 0.0
    %v1627 = vmax.f32 %v1180, 0.0
    %v1628 = vmax.f32 %v1331, 0.0
    %v1629 = vmax.f32 %v1333, 0.0
    %v1630 = vmax.f32 %v1484, 0.0
    %v1631 = vmax.f32 %v1486, 0.0
    %v1632 = vmax.f32 %v1031, 0.0
    %v1633 = vmax.f32 %v1033, 0.0
    %v1634 = vmax.f32 %v1184, 0.0
    %v1635 = vmax.f32 %v1186, 0.0
    %v1636 = vmax.f32 %v1337, 0.0
    %v1637 = vmax.f32 %v1339, 0.0
    %v1638 = vmax.f32 %v1490, 0.0
    %v1639 = vmax.f32 %v1492, 0.0
    %v1640 = vmax.f32 %v1035, 0.0
    %v1641 = vmax.f32 %v1037, 0.0
    %v1642 = vmax.f32 %v1188, 0.0
    %v1643 = vmax.f32 %v1190, 0.0
    %v1644 = vmax.f32 %v1341, 0.0
    %v1645 = vmax.f32 %v1343, 0.0
    %v1646 = vmax.f32 %v1494, 0.0
    %v1647 = vmax.f32 %v1496, 0.0
    %v1648 = vmax.f32 %v1041, 0.0
    %v1649 = vmax.f32 %v1043, 0.0
    %v1650 = vmax.f32 %v1194, 0.0
    %v1651 = vmax.f32 %v1196, 0.0
    %v1652 = vmax.f32 %v1347, 0.0
    %v1653 = vmax.f32 %v1349, 0.0
    %v1654 = vmax.f32 %v1500, 0.0
    %v1655 = vmax.f32 %v1502, 0.0
    %v1656 = vmax.f32 %v1045, 0.0
    %v1657 = vmax.f32 %v1047, 0.0
    %v1658 = vmax.f32 %v1198, 0.0
    %v1659 = vmax.f32 %v1200, 0.0
    %v1660 = vmax.f32 %v1351, 0.0
    %v1661 = vmax.f32 %v1353, 0.0
    %v1662 = vmax.f32 %v1504, 0.0
    %v1663 = vmax.f32 %v1506, 0.0
    %v1664 = vmax.f32 %v1051, 0.0
    %v1665 = vmax.f32 %v1053, 0.0
    %v1666 = vmax.f32 %v1204, 0.0
    %v1667 = vmax.f32 %v1206, 0.0
    %v1668 = vmax.f32 %v1357, 0.0
    %v1669 = vmax.f32 %v1359, 0.0
    %v1670 = vmax.f32 %v1510, 0.0
    %v1671 = vmax.f32 %v1512, 0.0
    %v1672 = vmax.f32 %v1055, 0.0
    %v1673 = vmax.f32 %v1057, 0.0
    %v1674 = vmax.f32 %v1208, 0.0
    %v1675 = vmax.f32 %v1210, 0.0
    %v1676 = vmax.f32 %v1361, 0.0
    %v1677 = vmax.f32 %v1363, 0.0
    %v1678 = vmax.f32 %v1514, 0.0
    %v1679 = vmax.f32 %v1516, 0.0
    %v1680 = vmax.f32 %v1061, 0.0
    %v1681 = vmax.f32 %v1063, 0.0
    %v1682 = vmax.f32 %v1214, 0.0
    %v1683 = vmax.f32 %v1216, 0.0
    %v1684 = vmax.f32 %v1367, 0.0
    %v1685 = vmax.f32 %v1369, 0.0
    %v1686 = vmax.f32 %v1520, 0.0
    %v1687 = vmax.f32 %v1522, 0.0
    %v1688 = vmax.f32 %v1065, 0.0
    %v1689 = vmax.f32 %v1067, 0.0
    %v1690 = vmax.f32 %v1218, 0.0
    %v1691 = vmax.f32 %v1220, 0.0
    %v1692 = vmax.f32 %v1371, 0.0
    %v1693 = vmax.f32 %v1373, 0.0
    %v1694 = vmax.f32 %v1524, 0.0
    %v1695 = vmax.f32 %v1526, 0.0
    %v1696 = vmax.f32 %v1071, 0.0
    %v1697 = vmax.f32 %v1073, 0.0
    %v1698 = vmax.f32 %v1224, 0.0
    %v1699 = vmax.f32 %v1226, 0.0
    %v1700 = vmax.f32 %v1377, 0.0
    %v1701 = vmax.f32 %v1379, 0.0
    %v1702 = vmax.f32 %v1530, 0.0
    %v1703 = vmax.f32 %v1532, 0.0
    %v1704 = vmax.f32 %v1075, 0.0
    %v1705 = vmax.f32 %v1077, 0.0
    %v1706 = vmax.f32 %v1228, 0.0
    %v1707 = vmax.f32 %v1230, 0.0
    %v1708 = vmax.f32 %v1381, 0.0
    %v1709 = vmax.f32 %v1383, 0.0
    %v1710 = vmax.f32 %v1534, 0.0
    %v1711 = vmax.f32 %v1536, 0.0
    %v1712 = vmax.f32 %v1081, 0.0
    %v1713 = vmax.f32 %v1083, 0.0
    %v1714 = vmax.f32 %v1234, 0.0
    %v1715 = vmax.f32 %v1236, 0.0
    %v1716 = vmax.f32 %v1387, 0.0
    %v1717 = vmax.f32 %v1389, 0.0
    %v1718 = vmax.f32 %v1540, 0.0
    %v1719 = vmax.f32 %v1542, 0.0
    %v1720 = vmax.f32 %v1085, 0.0
    %v1721 = vmax.f32 %v1087, 0.0
    %v1722 = vmax.f32 %v1238, 0.0
    %v1723 = vmax.f32 %v1240, 0.0
    %v1724 = vmax.f32 %v1391, 0.0
    %v1725 = vmax.f32 %v1393, 0.0
    %v1726 = vmax.f32 %v1544, 0.0
    %v1727 = vmax.f32 %v1546, 0.0
    %v1728 = vmax.f32 %v1091, 0.0
    %v1729 = vmax.f32 %v1093, 0.0
    %v1730 = vmax.f32 %v1244, 0.0
    %v1731 = vmax.f32 %v1246, 0.0
    %v1732 = vmax.f32 %v1397, 0.0
    %v1733 = vmax.f32 %v1399, 0.0
    %v1734 = vmax.f32 %v1550, 0.0
    %v1735 = vmax.f32 %v1552, 0.0
    %v1736 = vmax.f32 %v1095, 0.0
    %v1737 = vmax.f32 %v1097, 0.0
    %v1738 = vmax.f32 %v1248, 0.0
    %v1739 = vmax.f32 %v1250, 0.0
    %v1740 = vmax.f32 %v1401, 0.0
    %v1741 = vmax.f32 %v1403, 0.0
    %v1742 = vmax.f32 %v1554, 0.0
    %v1743 = vmax.f32 %v1556, 0.0
    %v1744 = vmax.f32 %v1101, 0.0
    %v1745 = vmax.f32 %v1103, 0.0
    %v1746 = vmax.f32 %v1254, 0.0
    %v1747 = vmax.f32 %v1256, 0.0
    %v1748 = vmax.f32 %v1407, 0.0
    %v1749 = vmax.f32 %v1409, 0.0
    %v1750 = vmax.f32 %v1560, 0.0
    %v1751 = vmax.f32 %v1562, 0.0
    %v1752 = vmax.f32 %v1105, 0.0
    %v1753 = vmax.f32 %v1107, 0.0
    %v1754 = vmax.f32 %v1258, 0.0
    %v1755 = vmax.f32 %v1260, 0.0
    %v1756 = vmax.f32 %v1411, 0.0
    %v1757 = vmax.f32 %v1413, 0.0
    %v1758 = vmax.f32 %v1564, 0.0
    %v1759 = vmax.f32 %v1566, 0.0
    %v1760 = vpack.c.bf16 %v1576, %v1568
    %v1761 = vpack.c.bf16 %v1577, %v1569
    %v1762 = vpack.c.bf16 %v1578, %v1570
    %v1763 = vpack.c.bf16 %v1579, %v1571
    %v1764 = vpack.c.bf16 %v1580, %v1572
    %v1765 = vpack.c.bf16 %v1581, %v1573
    %v1766 = vpack.c.bf16 %v1582, %v1574
    %v1767 = vpack.c.bf16 %v1583, %v1575
    %v1768 = vpack.c.bf16 %v1592, %v1584
    %v1769 = vpack.c.bf16 %v1593, %v1585
    %v1770 = vpack.c.bf16 %v1594, %v1586
    %v1771 = vpack.c.bf16 %v1595, %v1587
    %v1772 = vpack.c.bf16 %v1596, %v1588
    %v1773 = vpack.c.bf16 %v1597, %v1589
    %v1774 = vpack.c.bf16 %v1598, %v1590
    %v1775 = vpack.c.bf16 %v1599, %v1591
    %v1776 = vpack.c.bf16 %v1608, %v1600
    %v1777 = vpack.c.bf16 %v1609, %v1601
    %v1778 = vpack.c.bf16 %v1610, %v1602
    %v1779 = vpack.c.bf16 %v1611, %v1603
    %v1780 = vpack.c.bf16 %v1612, %v1604
    %v1781 = vpack.c.bf16 %v1613, %v1605
    %v1782 = vpack.c.bf16 %v1614, %v1606
    %v1783 = vpack.c.bf16 %v1615, %v1607
    %v1784 = vpack.c.bf16 %v1624, %v1616
    %v1785 = vpack.c.bf16 %v1625, %v1617
    %v1786 = vpack.c.bf16 %v1626, %v1618
    %v1787 = vpack.c.bf16 %v1627, %v1619
    %v1788 = vpack.c.bf16 %v1628, %v1620
    %v1789 = vpack.c.bf16 %v1629, %v1621
    %v1790 = vpack.c.bf16 %v1630, %v1622
    %v1791 = vpack.c.bf16 %v1631, %v1623
    %v1792 = vpack.c.bf16 %v1640, %v1632
    %v1793 = vpack.c.bf16 %v1641, %v1633
    %v1794 = vpack.c.bf16 %v1642, %v1634
    %v1795 = vpack.c.bf16 %v1643, %v1635
    %v1796 = vpack.c.bf16 %v1644, %v1636
    %v1797 = vpack.c.bf16 %v1645, %v1637
    %v1798 = vpack.c.bf16 %v1646, %v1638
    %v1799 = vpack.c.bf16 %v1647, %v1639
    %v1800 = vpack.c.bf16 %v1656, %v1648
    %v1801 = vpack.c.bf16 %v1657, %v1649
    %v1802 = vpack.c.bf16 %v1658, %v1650
    %v1803 = vpack.c.bf16 %v1659, %v1651
    %v1804 = vpack.c.bf16 %v1660, %v1652
    %v1805 = vpack.c.bf16 %v1661, %v1653
    %v1806 = vpack.c.bf16 %v1662, %v1654
    %v1807 = vpack.c.bf16 %v1663, %v1655
    %v1808 = vpack.c.bf16 %v1672, %v1664
    %v1809 = vpack.c.bf16 %v1673, %v1665
    %v1810 = vpack.c.bf16 %v1674, %v1666
    %v1811 = vpack.c.bf16 %v1675, %v1667
    %v1812 = vpack.c.bf16 %v1676, %v1668
    %v1813 = vpack.c.bf16 %v1677, %v1669
    %v1814 = vpack.c.bf16 %v1678, %v1670
    %v1815 = vpack.c.bf16 %v1679, %v1671
    %v1816 = vpack.c.bf16 %v1688, %v1680
    %v1817 = vpack.c.bf16 %v1689, %v1681
    %v1818 = vpack.c.bf16 %v1690, %v1682
    %v1819 = vpack.c.bf16 %v1691, %v1683
    %v1820 = vpack.c.bf16 %v1692, %v1684
    %v1821 = vpack.c.bf16 %v1693, %v1685
    %v1822 = vpack.c.bf16 %v1694, %v1686
    %v1823 = vpack.c.bf16 %v1695, %v1687
    %v1824 = vpack.c.bf16 %v1704, %v1696
    %v1825 = vpack.c.bf16 %v1705, %v1697
    %v1826 = vpack.c.bf16 %v1706, %v1698
    %v1827 = vpack.c.bf16 %v1707, %v1699
    %v1828 = vpack.c.bf16 %v1708, %v1700
    %v1829 = vpack.c.bf16 %v1709, %v1701
    %v1830 = vpack.c.bf16 %v1710, %v1702
    %v1831 = vpack.c.bf16 %v1711, %v1703
    %v1832 = vpack.c.bf16 %v1720, %v1712
    %v1833 = vpack.c.bf16 %v1721, %v1713
    %v1834 = vpack.c.bf16 %v1722, %v1714
    %v1835 = vpack.c.bf16 %v1723, %v1715
    %v1836 = vpack.c.bf16 %v1724, %v1716
    %v1837 = vpack.c.bf16 %v1725, %v1717
    %v1838 = vpack.c.bf16 %v1726, %v1718
    %v1839 = vpack.c.bf16 %v1727, %v1719
    %v1840 = vpack.c.bf16 %v1736, %v1728
    %v1841 = vpack.c.bf16 %v1737, %v1729
    %v1842 = vpack.c.bf16 %v1738, %v1730
    %v1843 = vpack.c.bf16 %v1739, %v1731
    %v1844 = vpack.c.bf16 %v1740, %v1732
    %v1845 = vpack.c.bf16 %v1741, %v1733
    %v1846 = vpack.c.bf16 %v1742, %v1734
    %v1847 = vpack.c.bf16 %v1743, %v1735
    %v1848 = vpack.c.bf16 %v1752, %v1744
    %v1849 = vpack.c.bf16 %v1753, %v1745
    %v1850 = vpack.c.bf16 %v1754, %v1746
    %v1851 = vpack.c.bf16 %v1755, %v1747
    %v1852 = vpack.c.bf16 %v1756, %v1748
    %v1853 = vpack.c.bf16 %v1757, %v1749
    %v1854 = vpack.c.bf16 %v1758, %v1750
    %v1855 = vpack.c.bf16 %v1759, %v1751
    %v1856 = vld [vmem:[#allocation8] sm:$0xff]
    %v1857 = vld [vmem:[#allocation8 + $0x8] sm:$0xff]
    %v1858 = vld [vmem:[#allocation8 + $0x10] sm:$0xff]
    %v1859 = vld [vmem:[#allocation8 + $0x18] sm:$0xff]
    %v1860 = vld [vmem:[#allocation8 + $0x20] sm:$0xff]
    %v1861 = vld [vmem:[#allocation8 + $0x28] sm:$0xff]
    %v1862 = vld [vmem:[#allocation8 + $0x30] sm:$0xff]
    %v1863 = vld [vmem:[#allocation8 + $0x38] sm:$0xff]
    %v1864 = vld [vmem:[#allocation8 + $0x40] sm:$0xff]
    %v1865 = vld [vmem:[#allocation8 + $0x48] sm:$0xff]
    %v1866 = vld [vmem:[#allocation8 + $0x50] sm:$0xff]
    %v1867 = vld [vmem:[#allocation8 + $0x58] sm:$0xff]
    %v1868 = vld [vmem:[#allocation8 + $0x60] sm:$0xff]
    %v1869 = vld [vmem:[#allocation8 + $0x68] sm:$0xff]
    %v1870 = vld [vmem:[#allocation8 + $0x70] sm:$0xff]
    %v1871 = vld [vmem:[#allocation8 + $0x78] sm:$0xff]
    %v1872 = vld [vmem:[#allocation8 + $0x80] sm:$0xff]
    %v1873 = vld [vmem:[#allocation8 + $0x88] sm:$0xff]
    %v1874 = vld [vmem:[#allocation8 + $0x90] sm:$0xff]
    %v1875 = vld [vmem:[#allocation8 + $0x98] sm:$0xff]
    %v1876 = vld [vmem:[#allocation8 + $0xa0] sm:$0xff]
    %v1877 = vld [vmem:[#allocation8 + $0xa8] sm:$0xff]
    %v1878 = vld [vmem:[#allocation8 + $0xb0] sm:$0xff]
    %v1879 = vld [vmem:[#allocation8 + $0xb8] sm:$0xff]
    %v1880 = vld [vmem:[#allocation8 + $0xc0] sm:$0xff]
    %v1881 = vld [vmem:[#allocation8 + $0xc8] sm:$0xff]
    %v1882 = vld [vmem:[#allocation8 + $0xd0] sm:$0xff]
    %v1883 = vld [vmem:[#allocation8 + $0xd8] sm:$0xff]
    %v1884 = vld [vmem:[#allocation8 + $0xe0] sm:$0xff]
    %v1885 = vld [vmem:[#allocation8 + $0xe8] sm:$0xff]
    %v1886 = vld [vmem:[#allocation8 + $0xf0] sm:$0xff]
    %v1887 = vld [vmem:[#allocation8 + $0xf8] sm:$0xff]
    %v1888 = vld [vmem:[#allocation8 + $0x100] sm:$0xff]
    %v1889 = vld [vmem:[#allocation8 + $0x108] sm:$0xff]
    %v1890 = vld [vmem:[#allocation8 + $0x110] sm:$0xff]
    %v1891 = vld [vmem:[#allocation8 + $0x118] sm:$0xff]
    %v1892 = vld [vmem:[#allocation8 + $0x120] sm:$0xff]
    %v1893 = vld [vmem:[#allocation8 + $0x128] sm:$0xff]
    %v1894 = vld [vmem:[#allocation8 + $0x130] sm:$0xff]
    %v1895 = vld [vmem:[#allocation8 + $0x138] sm:$0xff]
    %v1896 = vld [vmem:[#allocation8 + $0x140] sm:$0xff]
    %v1897 = vld [vmem:[#allocation8 + $0x148] sm:$0xff]
    %v1898 = vld [vmem:[#allocation8 + $0x150] sm:$0xff]
    %v1899 = vld [vmem:[#allocation8 + $0x158] sm:$0xff]
    %v1900 = vld [vmem:[#allocation8 + $0x160] sm:$0xff]
    %v1901 = vld [vmem:[#allocation8 + $0x168] sm:$0xff]
    %v1902 = vld [vmem:[#allocation8 + $0x170] sm:$0xff]
    %v1903 = vld [vmem:[#allocation8 + $0x178] sm:$0xff]
    %v1904 = vld [vmem:[#allocation8 + $0x180] sm:$0xff]
    %v1905 = vld [vmem:[#allocation8 + $0x188] sm:$0xff]
    %v1906 = vld [vmem:[#allocation8 + $0x190] sm:$0xff]
    %v1907 = vld [vmem:[#allocation8 + $0x198] sm:$0xff]
    %v1908 = vld [vmem:[#allocation8 + $0x1a0] sm:$0xff]
    %v1909 = vld [vmem:[#allocation8 + $0x1a8] sm:$0xff]
    %v1910 = vld [vmem:[#allocation8 + $0x1b0] sm:$0xff]
    %v1911 = vld [vmem:[#allocation8 + $0x1b8] sm:$0xff]
    %v1912 = vld [vmem:[#allocation8 + $0x1c0] sm:$0xff]
    %v1913 = vld [vmem:[#allocation8 + $0x1c8] sm:$0xff]
    %v1914 = vld [vmem:[#allocation8 + $0x1d0] sm:$0xff]
    %v1915 = vld [vmem:[#allocation8 + $0x1d8] sm:$0xff]
    %v1916 = vld [vmem:[#allocation8 + $0x1e0] sm:$0xff]
    %v1917 = vld [vmem:[#allocation8 + $0x1e8] sm:$0xff]
    %v1918 = vld [vmem:[#allocation8 + $0x1f0] sm:$0xff]
    %v1919 = vld [vmem:[#allocation8 + $0x1f8] sm:$0xff]
    %v1920 = vld [vmem:[#allocation8 + $0x200] sm:$0xff]
    %v1921 = vld [vmem:[#allocation8 + $0x208] sm:$0xff]
    %v1922 = vld [vmem:[#allocation8 + $0x210] sm:$0xff]
    %v1923 = vld [vmem:[#allocation8 + $0x218] sm:$0xff]
    %v1924 = vld [vmem:[#allocation8 + $0x220] sm:$0xff]
    %v1925 = vld [vmem:[#allocation8 + $0x228] sm:$0xff]
    %v1926 = vld [vmem:[#allocation8 + $0x230] sm:$0xff]
    %v1927 = vld [vmem:[#allocation8 + $0x238] sm:$0xff]
    %v1928 = vld [vmem:[#allocation8 + $0x240] sm:$0xff]
    %v1929 = vld [vmem:[#allocation8 + $0x248] sm:$0xff]
    %v1930 = vld [vmem:[#allocation8 + $0x250] sm:$0xff]
    %v1931 = vld [vmem:[#allocation8 + $0x258] sm:$0xff]
    %v1932 = vld [vmem:[#allocation8 + $0x260] sm:$0xff]
    %v1933 = vld [vmem:[#allocation8 + $0x268] sm:$0xff]
    %v1934 = vld [vmem:[#allocation8 + $0x270] sm:$0xff]
    %v1935 = vld [vmem:[#allocation8 + $0x278] sm:$0xff]
    %v1936 = vld [vmem:[#allocation8 + $0x280] sm:$0xff]
    %v1937 = vld [vmem:[#allocation8 + $0x288] sm:$0xff]
    %v1938 = vld [vmem:[#allocation8 + $0x290] sm:$0xff]
    %v1939 = vld [vmem:[#allocation8 + $0x298] sm:$0xff]
    %v1940 = vld [vmem:[#allocation8 + $0x2a0] sm:$0xff]
    %v1941 = vld [vmem:[#allocation8 + $0x2a8] sm:$0xff]
    %v1942 = vld [vmem:[#allocation8 + $0x2b0] sm:$0xff]
    %v1943 = vld [vmem:[#allocation8 + $0x2b8] sm:$0xff]
    %v1944 = vld [vmem:[#allocation8 + $0x2c0] sm:$0xff]
    %v1945 = vld [vmem:[#allocation8 + $0x2c8] sm:$0xff]
    %v1946 = vld [vmem:[#allocation8 + $0x2d0] sm:$0xff]
    %v1947 = vld [vmem:[#allocation8 + $0x2d8] sm:$0xff]
    %v1948 = vld [vmem:[#allocation8 + $0x2e0] sm:$0xff]
    %v1949 = vld [vmem:[#allocation8 + $0x2e8] sm:$0xff]
    %v1950 = vld [vmem:[#allocation8 + $0x2f0] sm:$0xff]
    %v1951 = vld [vmem:[#allocation8 + $0x2f8] sm:$0xff]
    %v1952 = vld [vmem:[#allocation8 + $0x300] sm:$0xff]
    %v1953 = vld [vmem:[#allocation8 + $0x308] sm:$0xff]
    %v1954 = vld [vmem:[#allocation8 + $0x310] sm:$0xff]
    %v1955 = vld [vmem:[#allocation8 + $0x318] sm:$0xff]
    %v1956 = vld [vmem:[#allocation8 + $0x320] sm:$0xff]
    %v1957 = vld [vmem:[#allocation8 + $0x328] sm:$0xff]
    %v1958 = vld [vmem:[#allocation8 + $0x330] sm:$0xff]
    %v1959 = vld [vmem:[#allocation8 + $0x338] sm:$0xff]
    %v1960 = vld [vmem:[#allocation8 + $0x340] sm:$0xff]
    %v1961 = vld [vmem:[#allocation8 + $0x348] sm:$0xff]
    %v1962 = vld [vmem:[#allocation8 + $0x350] sm:$0xff]
    %v1963 = vld [vmem:[#allocation8 + $0x358] sm:$0xff]
    %v1964 = vld [vmem:[#allocation8 + $0x360] sm:$0xff]
    %v1965 = vld [vmem:[#allocation8 + $0x368] sm:$0xff]
    %v1966 = vld [vmem:[#allocation8 + $0x370] sm:$0xff]
    %v1967 = vld [vmem:[#allocation8 + $0x378] sm:$0xff]
    %v1968 = vld [vmem:[#allocation8 + $0x380] sm:$0xff]
    %v1969 = vld [vmem:[#allocation8 + $0x388] sm:$0xff]
    %v1970 = vld [vmem:[#allocation8 + $0x390] sm:$0xff]
    %v1971 = vld [vmem:[#allocation8 + $0x398] sm:$0xff]
    %v1972 = vld [vmem:[#allocation8 + $0x3a0] sm:$0xff]
    %v1973 = vld [vmem:[#allocation8 + $0x3a8] sm:$0xff]
    %v1974 = vld [vmem:[#allocation8 + $0x3b0] sm:$0xff]
    %v1975 = vld [vmem:[#allocation8 + $0x3b8] sm:$0xff]
    %v1976 = vld [vmem:[#allocation8 + $0x3c0] sm:$0xff]
    %v1977 = vld [vmem:[#allocation8 + $0x3c8] sm:$0xff]
    %v1978 = vld [vmem:[#allocation8 + $0x3d0] sm:$0xff]
    %v1979 = vld [vmem:[#allocation8 + $0x3d8] sm:$0xff]
    %v1980 = vld [vmem:[#allocation8 + $0x3e0] sm:$0xff]
    %v1981 = vld [vmem:[#allocation8 + $0x3e8] sm:$0xff]
    %v1982 = vld [vmem:[#allocation8 + $0x3f0] sm:$0xff]
    %v1983 = vld [vmem:[#allocation8 + $0x3f8] sm:$0xff]
    %v1984 = vld [vmem:[%s4] sm:$0x3]
    %v1986 = vlaneseq
    %v1987 = vshrl.u32 %v1986, 7
    %v1988 = vsub.s32 0, %v1987
    %v1989 = vrot.slane %v1984, %v1988
    %v1990 = vlaneseq
    %v1991 = vshrl.u32 %v1990, 7
    %v1992 = vsub.s32 1, %v1991
    %v1993 = vrot.slane %v1984, %v1992
    %v2124 = vunpack.c.l.b16 %v1856
    %v2125 = vunpack.c.h.b16 %v1856
    %v2126 = vunpack.c.l.b16 %v1857
    %v2127 = vunpack.c.h.b16 %v1857
    %v2128 = vunpack.c.l.b16 %v1858
    %v2129 = vunpack.c.h.b16 %v1858
    %v2130 = vunpack.c.l.b16 %v1859
    %v2131 = vunpack.c.h.b16 %v1859
    %v2132 = vunpack.c.l.b16 %v1860
    %v2133 = vunpack.c.h.b16 %v1860
    %v2134 = vunpack.c.l.b16 %v1861
    %v2135 = vunpack.c.h.b16 %v1861
    %v2136 = vunpack.c.l.b16 %v1862
    %v2137 = vunpack.c.h.b16 %v1862
    %v2138 = vunpack.c.l.b16 %v1863
    %v2139 = vunpack.c.h.b16 %v1863
    %v2140 = vunpack.c.l.b16 %v1864
    %v2141 = vunpack.c.h.b16 %v1864
    %v2142 = vunpack.c.l.b16 %v1865
    %v2143 = vunpack.c.h.b16 %v1865
    %v2144 = vunpack.c.l.b16 %v1866
    %v2145 = vunpack.c.h.b16 %v1866
    %v2146 = vunpack.c.l.b16 %v1867
    %v2147 = vunpack.c.h.b16 %v1867
    %v2148 = vunpack.c.l.b16 %v1868
    %v2149 = vunpack.c.h.b16 %v1868
    %v2150 = vunpack.c.l.b16 %v1869
    %v2151 = vunpack.c.h.b16 %v1869
    %v2152 = vunpack.c.l.b16 %v1870
    %v2153 = vunpack.c.h.b16 %v1870
    %v2154 = vunpack.c.l.b16 %v1871
    %v2155 = vunpack.c.h.b16 %v1871
    %v2156 = vunpack.c.l.b16 %v1872
    %v2157 = vunpack.c.h.b16 %v1872
    %v2158 = vunpack.c.l.b16 %v1873
    %v2159 = vunpack.c.h.b16 %v1873
    %v2160 = vunpack.c.l.b16 %v1874
    %v2161 = vunpack.c.h.b16 %v1874
    %v2162 = vunpack.c.l.b16 %v1875
    %v2163 = vunpack.c.h.b16 %v1875
    %v2164 = vunpack.c.l.b16 %v1876
    %v2165 = vunpack.c.h.b16 %v1876
    %v2166 = vunpack.c.l.b16 %v1877
    %v2167 = vunpack.c.h.b16 %v1877
    %v2168 = vunpack.c.l.b16 %v1878
    %v2169 = vunpack.c.h.b16 %v1878
    %v2170 = vunpack.c.l.b16 %v1879
    %v2171 = vunpack.c.h.b16 %v1879
    %v2172 = vunpack.c.l.b16 %v1880
    %v2173 = vunpack.c.h.b16 %v1880
    %v2174 = vunpack.c.l.b16 %v1881
    %v2175 = vunpack.c.h.b16 %v1881
    %v2176 = vunpack.c.l.b16 %v1882
    %v2177 = vunpack.c.h.b16 %v1882
    %v2178 = vunpack.c.l.b16 %v1883
    %v2179 = vunpack.c.h.b16 %v1883
    %v2180 = vunpack.c.l.b16 %v1884
    %v2181 = vunpack.c.h.b16 %v1884
    %v2182 = vunpack.c.l.b16 %v1885
    %v2183 = vunpack.c.h.b16 %v1885
    %v2184 = vunpack.c.l.b16 %v1886
    %v2185 = vunpack.c.h.b16 %v1886
    %v2186 = vunpack.c.l.b16 %v1887
    %v2187 = vunpack.c.h.b16 %v1887
    %v2188 = vunpack.c.l.b16 %v1888
    %v2189 = vunpack.c.h.b16 %v1888
    %v2190 = vunpack.c.l.b16 %v1889
    %v2191 = vunpack.c.h.b16 %v1889
    %v2192 = vunpack.c.l.b16 %v1890
    %v2193 = vunpack.c.h.b16 %v1890
    %v2194 = vunpack.c.l.b16 %v1891
    %v2195 = vunpack.c.h.b16 %v1891
    %v2196 = vunpack.c.l.b16 %v1892
    %v2197 = vunpack.c.h.b16 %v1892
    %v2198 = vunpack.c.l.b16 %v1893
    %v2199 = vunpack.c.h.b16 %v1893
    %v2200 = vunpack.c.l.b16 %v1894
    %v2201 = vunpack.c.h.b16 %v1894
    %v2202 = vunpack.c.l.b16 %v1895
    %v2203 = vunpack.c.h.b16 %v1895
    %v2204 = vunpack.c.l.b16 %v1896
    %v2205 = vunpack.c.h.b16 %v1896
    %v2206 = vunpack.c.l.b16 %v1897
    %v2207 = vunpack.c.h.b16 %v1897
    %v2208 = vunpack.c.l.b16 %v1898
    %v2209 = vunpack.c.h.b16 %v1898
    %v2210 = vunpack.c.l.b16 %v1899
    %v2211 = vunpack.c.h.b16 %v1899
    %v2212 = vunpack.c.l.b16 %v1900
    %v2213 = vunpack.c.h.b16 %v1900
    %v2214 = vunpack.c.l.b16 %v1901
    %v2215 = vunpack.c.h.b16 %v1901
    %v2216 = vunpack.c.l.b16 %v1902
    %v2217 = vunpack.c.h.b16 %v1902
    %v2218 = vunpack.c.l.b16 %v1903
    %v2219 = vunpack.c.h.b16 %v1903
    %v2220 = vunpack.c.l.b16 %v1904
    %v2221 = vunpack.c.h.b16 %v1904
    %v2222 = vunpack.c.l.b16 %v1905
    %v2223 = vunpack.c.h.b16 %v1905
    %v2224 = vunpack.c.l.b16 %v1906
    %v2225 = vunpack.c.h.b16 %v1906
    %v2226 = vunpack.c.l.b16 %v1907
    %v2227 = vunpack.c.h.b16 %v1907
    %v2228 = vunpack.c.l.b16 %v1908
    %v2229 = vunpack.c.h.b16 %v1908
    %v2230 = vunpack.c.l.b16 %v1909
    %v2231 = vunpack.c.h.b16 %v1909
    %v2232 = vunpack.c.l.b16 %v1910
    %v2233 = vunpack.c.h.b16 %v1910
    %v2234 = vunpack.c.l.b16 %v1911
    %v2235 = vunpack.c.h.b16 %v1911
    %v2236 = vunpack.c.l.b16 %v1912
    %v2237 = vunpack.c.h.b16 %v1912
    %v2238 = vunpack.c.l.b16 %v1913
    %v2239 = vunpack.c.h.b16 %v1913
    %v2240 = vunpack.c.l.b16 %v1914
    %v2241 = vunpack.c.h.b16 %v1914
    %v2242 = vunpack.c.l.b16 %v1915
    %v2243 = vunpack.c.h.b16 %v1915
    %v2244 = vunpack.c.l.b16 %v1916
    %v2245 = vunpack.c.h.b16 %v1916
    %v2246 = vunpack.c.l.b16 %v1917
    %v2247 = vunpack.c.h.b16 %v1917
    %v2248 = vunpack.c.l.b16 %v1918
    %v2249 = vunpack.c.h.b16 %v1918
    %v2250 = vunpack.c.l.b16 %v1919
    %v2251 = vunpack.c.h.b16 %v1919
    %v2252 = vunpack.c.l.b16 %v1920
    %v2253 = vunpack.c.h.b16 %v1920
    %v2254 = vunpack.c.l.b16 %v1921
    %v2255 = vunpack.c.h.b16 %v1921
    %v2256 = vunpack.c.l.b16 %v1922
    %v2257 = vunpack.c.h.b16 %v1922
    %v2258 = vunpack.c.l.b16 %v1923
    %v2259 = vunpack.c.h.b16 %v1923
    %v2260 = vunpack.c.l.b16 %v1924
    %v2261 = vunpack.c.h.b16 %v1924
    %v2262 = vunpack.c.l.b16 %v1925
    %v2263 = vunpack.c.h.b16 %v1925
    %v2264 = vunpack.c.l.b16 %v1926
    %v2265 = vunpack.c.h.b16 %v1926
    %v2266 = vunpack.c.l.b16 %v1927
    %v2267 = vunpack.c.h.b16 %v1927
    %v2268 = vunpack.c.l.b16 %v1928
    %v2269 = vunpack.c.h.b16 %v1928
    %v2270 = vunpack.c.l.b16 %v1929
    %v2271 = vunpack.c.h.b16 %v1929
    %v2272 = vunpack.c.l.b16 %v1930
    %v2273 = vunpack.c.h.b16 %v1930
    %v2274 = vunpack.c.l.b16 %v1931
    %v2275 = vunpack.c.h.b16 %v1931
    %v2276 = vunpack.c.l.b16 %v1932
    %v2277 = vunpack.c.h.b16 %v1932
    %v2278 = vunpack.c.l.b16 %v1933
    %v2279 = vunpack.c.h.b16 %v1933
    %v2280 = vunpack.c.l.b16 %v1934
    %v2281 = vunpack.c.h.b16 %v1934
    %v2282 = vunpack.c.l.b16 %v1935
    %v2283 = vunpack.c.h.b16 %v1935
    %v2284 = vunpack.c.l.b16 %v1936
    %v2285 = vunpack.c.h.b16 %v1936
    %v2286 = vunpack.c.l.b16 %v1937
    %v2287 = vunpack.c.h.b16 %v1937
    %v2288 = vunpack.c.l.b16 %v1938
    %v2289 = vunpack.c.h.b16 %v1938
    %v2290 = vunpack.c.l.b16 %v1939
    %v2291 = vunpack.c.h.b16 %v1939
    %v2292 = vunpack.c.l.b16 %v1940
    %v2293 = vunpack.c.h.b16 %v1940
    %v2294 = vunpack.c.l.b16 %v1941
    %v2295 = vunpack.c.h.b16 %v1941
    %v2296 = vunpack.c.l.b16 %v1942
    %v2297 = vunpack.c.h.b16 %v1942
    %v2298 = vunpack.c.l.b16 %v1943
    %v2299 = vunpack.c.h.b16 %v1943
    %v2300 = vunpack.c.l.b16 %v1944
    %v2301 = vunpack.c.h.b16 %v1944
    %v2302 = vunpack.c.l.b16 %v1945
    %v2303 = vunpack.c.h.b16 %v1945
    %v2304 = vunpack.c.l.b16 %v1946
    %v2305 = vunpack.c.h.b16 %v1946
    %v2306 = vunpack.c.l.b16 %v1947
    %v2307 = vunpack.c.h.b16 %v1947
    %v2308 = vunpack.c.l.b16 %v1948
    %v2309 = vunpack.c.h.b16 %v1948
    %v2310 = vunpack.c.l.b16 %v1949
    %v2311 = vunpack.c.h.b16 %v1949
    %v2312 = vunpack.c.l.b16 %v1950
    %v2313 = vunpack.c.h.b16 %v1950
    %v2314 = vunpack.c.l.b16 %v1951
    %v2315 = vunpack.c.h.b16 %v1951
    %v2316 = vunpack.c.l.b16 %v1952
    %v2317 = vunpack.c.h.b16 %v1952
    %v2318 = vunpack.c.l.b16 %v1953
    %v2319 = vunpack.c.h.b16 %v1953
    %v2320 = vunpack.c.l.b16 %v1954
    %v2321 = vunpack.c.h.b16 %v1954
    %v2322 = vunpack.c.l.b16 %v1955
    %v2323 = vunpack.c.h.b16 %v1955
    %v2324 = vunpack.c.l.b16 %v1956
    %v2325 = vunpack.c.h.b16 %v1956
    %v2326 = vunpack.c.l.b16 %v1957
    %v2327 = vunpack.c.h.b16 %v1957
    %v2328 = vunpack.c.l.b16 %v1958
    %v2329 = vunpack.c.h.b16 %v1958
    %v2330 = vunpack.c.l.b16 %v1959
    %v2331 = vunpack.c.h.b16 %v1959
    %v2332 = vunpack.c.l.b16 %v1960
    %v2333 = vunpack.c.h.b16 %v1960
    %v2334 = vunpack.c.l.b16 %v1961
    %v2335 = vunpack.c.h.b16 %v1961
    %v2336 = vunpack.c.l.b16 %v1962
    %v2337 = vunpack.c.h.b16 %v1962
    %v2338 = vunpack.c.l.b16 %v1963
    %v2339 = vunpack.c.h.b16 %v1963
    %v2340 = vunpack.c.l.b16 %v1964
    %v2341 = vunpack.c.h.b16 %v1964
    %v2342 = vunpack.c.l.b16 %v1965
    %v2343 = vunpack.c.h.b16 %v1965
    %v2344 = vunpack.c.l.b16 %v1966
    %v2345 = vunpack.c.h.b16 %v1966
    %v2346 = vunpack.c.l.b16 %v1967
    %v2347 = vunpack.c.h.b16 %v1967
    %v2348 = vunpack.c.l.b16 %v1968
    %v2349 = vunpack.c.h.b16 %v1968
    %v2350 = vunpack.c.l.b16 %v1969
    %v2351 = vunpack.c.h.b16 %v1969
    %v2352 = vunpack.c.l.b16 %v1970
    %v2353 = vunpack.c.h.b16 %v1970
    %v2354 = vunpack.c.l.b16 %v1971
    %v2355 = vunpack.c.h.b16 %v1971
    %v2356 = vunpack.c.l.b16 %v1972
    %v2357 = vunpack.c.h.b16 %v1972
    %v2358 = vunpack.c.l.b16 %v1973
    %v2359 = vunpack.c.h.b16 %v1973
    %v2360 = vunpack.c.l.b16 %v1974
    %v2361 = vunpack.c.h.b16 %v1974
    %v2362 = vunpack.c.l.b16 %v1975
    %v2363 = vunpack.c.h.b16 %v1975
    %v2364 = vunpack.c.l.b16 %v1976
    %v2365 = vunpack.c.h.b16 %v1976
    %v2366 = vunpack.c.l.b16 %v1977
    %v2367 = vunpack.c.h.b16 %v1977
    %v2368 = vunpack.c.l.b16 %v1978
    %v2369 = vunpack.c.h.b16 %v1978
    %v2370 = vunpack.c.l.b16 %v1979
    %v2371 = vunpack.c.h.b16 %v1979
    %v2372 = vunpack.c.l.b16 %v1980
    %v2373 = vunpack.c.h.b16 %v1980
    %v2374 = vunpack.c.l.b16 %v1981
    %v2375 = vunpack.c.h.b16 %v1981
    %v2376 = vunpack.c.l.b16 %v1982
    %v2377 = vunpack.c.h.b16 %v1982
    %v2378 = vunpack.c.l.b16 %v1983
    %v2379 = vunpack.c.h.b16 %v1983
    %v2380 = vpack.c.b16 %v2126, %v2124
    %v2381 = vpack.c.b16 %v2127, %v2125
    %v2382 = vpack.c.b16 %v2130, %v2128
    %v2383 = vpack.c.b16 %v2131, %v2129
    %v2384 = vpack.c.b16 %v2134, %v2132
    %v2385 = vpack.c.b16 %v2135, %v2133
    %v2386 = vpack.c.b16 %v2138, %v2136
    %v2387 = vpack.c.b16 %v2139, %v2137
    %v2388 = vpack.c.b16 %v2142, %v2140
    %v2389 = vpack.c.b16 %v2143, %v2141
    %v2390 = vpack.c.b16 %v2146, %v2144
    %v2391 = vpack.c.b16 %v2147, %v2145
    %v2392 = vpack.c.b16 %v2150, %v2148
    %v2393 = vpack.c.b16 %v2151, %v2149
    %v2394 = vpack.c.b16 %v2154, %v2152
    %v2395 = vpack.c.b16 %v2155, %v2153
    %v2396 = vpack.c.b16 %v2158, %v2156
    %v2397 = vpack.c.b16 %v2159, %v2157
    %v2398 = vpack.c.b16 %v2162, %v2160
    %v2399 = vpack.c.b16 %v2163, %v2161
    %v2400 = vpack.c.b16 %v2166, %v2164
    %v2401 = vpack.c.b16 %v2167, %v2165
    %v2402 = vpack.c.b16 %v2170, %v2168
    %v2403 = vpack.c.b16 %v2171, %v2169
    %v2404 = vpack.c.b16 %v2174, %v2172
    %v2405 = vpack.c.b16 %v2175, %v2173
    %v2406 = vpack.c.b16 %v2178, %v2176
    %v2407 = vpack.c.b16 %v2179, %v2177
    %v2408 = vpack.c.b16 %v2182, %v2180
    %v2409 = vpack.c.b16 %v2183, %v2181
    %v2410 = vpack.c.b16 %v2186, %v2184
    %v2411 = vpack.c.b16 %v2187, %v2185
    %v2412 = vpack.c.b16 %v2190, %v2188
    %v2413 = vpack.c.b16 %v2191, %v2189
    %v2414 = vpack.c.b16 %v2194, %v2192
    %v2415 = vpack.c.b16 %v2195, %v2193
    %v2416 = vpack.c.b16 %v2198, %v2196
    %v2417 = vpack.c.b16 %v2199, %v2197
    %v2418 = vpack.c.b16 %v2202, %v2200
    %v2419 = vpack.c.b16 %v2203, %v2201
    %v2420 = vpack.c.b16 %v2206, %v2204
    %v2421 = vpack.c.b16 %v2207, %v2205
    %v2422 = vpack.c.b16 %v2210, %v2208
    %v2423 = vpack.c.b16 %v2211, %v2209
    %v2424 = vpack.c.b16 %v2214, %v2212
    %v2425 = vpack.c.b16 %v2215, %v2213
    %v2426 = vpack.c.b16 %v2218, %v2216
    %v2427 = vpack.c.b16 %v2219, %v2217
    %v2428 = vpack.c.b16 %v2222, %v2220
    %v2429 = vpack.c.b16 %v2223, %v2221
    %v2430 = vpack.c.b16 %v2226, %v2224
    %v2431 = vpack.c.b16 %v2227, %v2225
    %v2432 = vpack.c.b16 %v2230, %v2228
    %v2433 = vpack.c.b16 %v2231, %v2229
    %v2434 = vpack.c.b16 %v2234, %v2232
    %v2435 = vpack.c.b16 %v2235, %v2233
    %v2436 = vpack.c.b16 %v2238, %v2236
    %v2437 = vpack.c.b16 %v2239, %v2237
    %v2438 = vpack.c.b16 %v2242, %v2240
    %v2439 = vpack.c.b16 %v2243, %v2241
    %v2440 = vpack.c.b16 %v2246, %v2244
    %v2441 = vpack.c.b16 %v2247, %v2245
    %v2442 = vpack.c.b16 %v2250, %v2248
    %v2443 = vpack.c.b16 %v2251, %v2249
    %v2444 = vpack.c.b16 %v2254, %v2252
    %v2445 = vpack.c.b16 %v2255, %v2253
    %v2446 = vpack.c.b16 %v2258, %v2256
    %v2447 = vpack.c.b16 %v2259, %v2257
    %v2448 = vpack.c.b16 %v2262, %v2260
    %v2449 = vpack.c.b16 %v2263, %v2261
    %v2450 = vpack.c.b16 %v2266, %v2264
    %v2451 = vpack.c.b16 %v2267, %v2265
    %v2452 = vpack.c.b16 %v2270, %v2268
    %v2453 = vpack.c.b16 %v2271, %v2269
    %v2454 = vpack.c.b16 %v2274, %v2272
    %v2455 = vpack.c.b16 %v2275, %v2273
    %v2456 = vpack.c.b16 %v2278, %v2276
    %v2457 = vpack.c.b16 %v2279, %v2277
    %v2458 = vpack.c.b16 %v2282, %v2280
    %v2459 = vpack.c.b16 %v2283, %v2281
    %v2460 = vpack.c.b16 %v2286, %v2284
    %v2461 = vpack.c.b16 %v2287, %v2285
    %v2462 = vpack.c.b16 %v2290, %v2288
    %v2463 = vpack.c.b16 %v2291, %v2289
    %v2464 = vpack.c.b16 %v2294, %v2292
    %v2465 = vpack.c.b16 %v2295, %v2293
    %v2466 = vpack.c.b16 %v2298, %v2296
    %v2467 = vpack.c.b16 %v2299, %v2297
    %v2468 = vpack.c.b16 %v2302, %v2300
    %v2469 = vpack.c.b16 %v2303, %v2301
    %v2470 = vpack.c.b16 %v2306, %v2304
    %v2471 = vpack.c.b16 %v2307, %v2305
    %v2472 = vpack.c.b16 %v2310, %v2308
    %v2473 = vpack.c.b16 %v2311, %v2309
    %v2474 = vpack.c.b16 %v2314, %v2312
    %v2475 = vpack.c.b16 %v2315, %v2313
    %v2476 = vpack.c.b16 %v2318, %v2316
    %v2477 = vpack.c.b16 %v2319, %v2317
    %v2478 = vpack.c.b16 %v2322, %v2320
    %v2479 = vpack.c.b16 %v2323, %v2321
    %v2480 = vpack.c.b16 %v2326, %v2324
    %v2481 = vpack.c.b16 %v2327, %v2325
    %v2482 = vpack.c.b16 %v2330, %v2328
    %v2483 = vpack.c.b16 %v2331, %v2329
    %v2484 = vpack.c.b16 %v2334, %v2332
    %v2485 = vpack.c.b16 %v2335, %v2333
    %v2486 = vpack.c.b16 %v2338, %v2336
    %v2487 = vpack.c.b16 %v2339, %v2337
    %v2488 = vpack.c.b16 %v2342, %v2340
    %v2489 = vpack.c.b16 %v2343, %v2341
    %v2490 = vpack.c.b16 %v2346, %v2344
    %v2491 = vpack.c.b16 %v2347, %v2345
    %v2492 = vpack.c.b16 %v2350, %v2348
    %v2493 = vpack.c.b16 %v2351, %v2349
    %v2494 = vpack.c.b16 %v2354, %v2352
    %v2495 = vpack.c.b16 %v2355, %v2353
    %v2496 = vpack.c.b16 %v2358, %v2356
    %v2497 = vpack.c.b16 %v2359, %v2357
    %v2498 = vpack.c.b16 %v2362, %v2360
    %v2499 = vpack.c.b16 %v2363, %v2361
    %v2500 = vpack.c.b16 %v2366, %v2364
    %v2501 = vpack.c.b16 %v2367, %v2365
    %v2502 = vpack.c.b16 %v2370, %v2368
    %v2503 = vpack.c.b16 %v2371, %v2369
    %v2504 = vpack.c.b16 %v2374, %v2372
    %v2505 = vpack.c.b16 %v2375, %v2373
    %v2506 = vpack.c.b16 %v2378, %v2376
    %v2507 = vpack.c.b16 %v2379, %v2377
    %2636 = vmatprep.subr.bf16.mxu0 %v2381
    %2637 = vmatpush1.bf16.msra.mxu0 %v2380
    %2638 = vmatprep.subr.bf16.mxu0 %v2383
    %2639 = vmatpush1.bf16.msra.mxu0 %v2382
    %2640 = vmatprep.subr.bf16.mxu0 %v2385
    %2641 = vmatpush1.bf16.msra.mxu0 %v2384
    %2642 = vmatprep.subr.bf16.mxu0 %v2387
    %2643 = vmatpush1.bf16.msra.mxu0 %v2386
    %2644 = vmatprep.subr.bf16.mxu0 %v2389
    %2645 = vmatpush1.bf16.msra.mxu0 %v2388
    %2646 = vmatprep.subr.bf16.mxu0 %v2391
    %2647 = vmatpush1.bf16.msra.mxu0 %v2390
    %2648 = vmatprep.subr.bf16.mxu0 %v2393
    %2649 = vmatpush1.bf16.msra.mxu0 %v2392
    %2650 = vmatprep.subr.bf16.mxu0 %v2395
    %2651 = vmatpush1.bf16.msra.mxu0 %v2394
    %2652 = vmatprep.subr.bf16.mxu0 %v2397
    %2653 = vmatpush1.bf16.msra.mxu0 %v2396
    %2654 = vmatprep.subr.bf16.mxu0 %v2399
    %2655 = vmatpush1.bf16.msra.mxu0 %v2398
    %2656 = vmatprep.subr.bf16.mxu0 %v2401
    %2657 = vmatpush1.bf16.msra.mxu0 %v2400
    %2658 = vmatprep.subr.bf16.mxu0 %v2403
    %2659 = vmatpush1.bf16.msra.mxu0 %v2402
    %2660 = vmatprep.subr.bf16.mxu0 %v2405
    %2661 = vmatpush1.bf16.msra.mxu0 %v2404
    %2662 = vmatprep.subr.bf16.mxu0 %v2407
    %2663 = vmatpush1.bf16.msra.mxu0 %v2406
    %2664 = vmatprep.subr.bf16.mxu0 %v2409
    %2665 = vmatpush1.bf16.msra.mxu0 %v2408
    %2666 = vmatprep.subr.bf16.mxu0 %v2411
    %2667 = vmatpush1.bf16.msra.mxu0 %v2410
    %2668 = vmatprep.mubr.bf16.mxu0 %v1761
    %2669 = vmatmul.mubr.bf16.gmra.mrb[0].mxu0 %v1760
    %v2670 = vpop.f32.mrb[0].mxu0
    %v2671 = vadd.f32 %v1989, %v2670
    %v2672 = vpop.f32.mrb[0].mxu0
    %v2673 = vadd.f32 %v1993, %v2672
    %v2674 = vpop.f32.mrb[0].mxu0
    %v2675 = vadd.f32 %v1989, %v2674
    %v2676 = vpop.f32.mrb[0].mxu0
    %v2677 = vadd.f32 %v1993, %v2676
    %2678 = vmatprep.mubr.bf16.mxu0 %v1769
    %2679 = vmatmul.mubr.bf16.gmra.mrb[0].mxu0 %v1768
    %v2680 = vpop.f32.mrb[0].mxu0
    %v2681 = vadd.f32 %v1989, %v2680
    %v2682 = vpop.f32.mrb[0].mxu0
    %v2683 = vadd.f32 %v1993, %v2682
    %v2684 = vpop.f32.mrb[0].mxu0
    %v2685 = vadd.f32 %v1989, %v2684
    %v2686 = vpop.f32.mrb[0].mxu0
    %v2687 = vadd.f32 %v1993, %v2686
    %2688 = vmatprep.mubr.bf16.mxu0 %v1777
    %2689 = vmatmul.mubr.bf16.gmra.mrb[0].mxu0 %v1776
    %v2690 = vpop.f32.mrb[0].mxu0
    %v2691 = vadd.f32 %v1989, %v2690
    %v2692 = vpop.f32.mrb[0].mxu0
    %v2693 = vadd.f32 %v1993, %v2692
    %v2694 = vpop.f32.mrb[0].mxu0
    %v2695 = vadd.f32 %v1989, %v2694
    %v2696 = vpop.f32.mrb[0].mxu0
    %v2697 = vadd.f32 %v1993, %v2696
    %2698 = vmatprep.mubr.bf16.mxu0 %v1785
    %2699 = vmatmul.mubr.bf16.gmra.mrb[0].mxu0 %v1784
    %v2700 = vpop.f32.mrb[0].mxu0
    %v2701 = vadd.f32 %v1989, %v2700
    %v2702 = vpop.f32.mrb[0].mxu0
    %v2703 = vadd.f32 %v1993, %v2702
    %v2704 = vpop.f32.mrb[0].mxu0
    %v2705 = vadd.f32 %v1989, %v2704
    %v2706 = vpop.f32.mrb[0].mxu0
    %v2707 = vadd.f32 %v1993, %v2706
    %2708 = vmatprep.mubr.bf16.mxu0 %v1793
    %2709 = vmatmul.mubr.bf16.gmra.mrb[0].mxu0 %v1792
    %v2710 = vpop.f32.mrb[0].mxu0
    %v2711 = vadd.f32 %v1989, %v2710
    %v2712 = vpop.f32.mrb[0].mxu0
    %v2713 = vadd.f32 %v1993, %v2712
    %v2714 = vpop.f32.mrb[0].mxu0
    %v2715 = vadd.f32 %v1989, %v2714
    %v2716 = vpop.f32.mrb[0].mxu0
    %v2717 = vadd.f32 %v1993, %v2716
    %2718 = vmatprep.mubr.bf16.mxu0 %v1801
    %2719 = vmatmul.mubr.bf16.gmra.mrb[0].mxu0 %v1800
    %v2720 = vpop.f32.mrb[0].mxu0
    %v2721 = vadd.f32 %v1989, %v2720
    %v2722 = vpop.f32.mrb[0].mxu0
    %v2723 = vadd.f32 %v1993, %v2722
    %v2724 = vpop.f32.mrb[0].mxu0
    %v2725 = vadd.f32 %v1989, %v2724
    %v2726 = vpop.f32.mrb[0].mxu0
    %v2727 = vadd.f32 %v1993, %v2726
    %2728 = vmatprep.mubr.bf16.mxu0 %v1809
    %2729 = vmatmul.mubr.bf16.gmra.mrb[0].mxu0 %v1808
    %v2730 = vpop.f32.mrb[0].mxu0
    %v2731 = vadd.f32 %v1989, %v2730
    %v2732 = vpop.f32.mrb[0].mxu0
    %v2733 = vadd.f32 %v1993, %v2732
    %v2734 = vpop.f32.mrb[0].mxu0
    %v2735 = vadd.f32 %v1989, %v2734
    %v2736 = vpop.f32.mrb[0].mxu0
    %v2737 = vadd.f32 %v1993, %v2736
    %2738 = vmatprep.mubr.bf16.mxu0 %v1817
    %2739 = vmatmul.mubr.bf16.gmra.mrb[0].mxu0 %v1816
    %v2740 = vpop.f32.mrb[0].mxu0
    %v2741 = vadd.f32 %v1989, %v2740
    %v2742 = vpop.f32.mrb[0].mxu0
    %v2743 = vadd.f32 %v1993, %v2742
    %v2744 = vpop.f32.mrb[0].mxu0
    %v2745 = vadd.f32 %v1989, %v2744
    %v2746 = vpop.f32.mrb[0].mxu0
    %v2747 = vadd.f32 %v1993, %v2746
    %2748 = vmatprep.mubr.bf16.mxu0 %v1825
    %2749 = vmatmul.mubr.bf16.gmra.mrb[0].mxu0 %v1824
    %v2750 = vpop.f32.mrb[0].mxu0
    %v2751 = vadd.f32 %v1989, %v2750
    %v2752 = vpop.f32.mrb[0].mxu0
    %v2753 = vadd.f32 %v1993, %v2752
    %v2754 = vpop.f32.mrb[0].mxu0
    %v2755 = vadd.f32 %v1989, %v2754
    %v2756 = vpop.f32.mrb[0].mxu0
    %v2757 = vadd.f32 %v1993, %v2756
    %2758 = vmatprep.mubr.bf16.mxu0 %v1833
    %2759 = vmatmul.mubr.bf16.gmra.mrb[0].mxu0 %v1832
    %v2760 = vpop.f32.mrb[0].mxu0
    %v2761 = vadd.f32 %v1989, %v2760
    %v2762 = vpop.f32.mrb[0].mxu0
    %v2763 = vadd.f32 %v1993, %v2762
    %v2764 = vpop.f32.mrb[0].mxu0
    %v2765 = vadd.f32 %v1989, %v2764
    %v2766 = vpop.f32.mrb[0].mxu0
    %v2767 = vadd.f32 %v1993, %v2766
    %2768 = vmatprep.mubr.bf16.mxu0 %v1841
    %2769 = vmatmul.mubr.bf16.gmra.mrb[0].mxu0 %v1840
    %v2770 = vpop.f32.mrb[0].mxu0
    %v2771 = vadd.f32 %v1989, %v2770
    %v2772 = vpop.f32.mrb[0].mxu0
    %v2773 = vadd.f32 %v1993, %v2772
    %v2774 = vpop.f32.mrb[0].mxu0
    %v2775 = vadd.f32 %v1989, %v2774
    %v2776 = vpop.f32.mrb[0].mxu0
    %v2777 = vadd.f32 %v1993, %v2776
    %2778 = vmatprep.mubr.bf16.mxu0 %v1849
    %2779 = vmatmul.mubr.bf16.gmra.mrb[0].mxu0 %v1848
    %v2780 = vpop.f32.mrb[0].mxu0
    %v2781 = vadd.f32 %v1989, %v2780
    %v2782 = vpop.f32.mrb[0].mxu0
    %v2783 = vadd.f32 %v1993, %v2782
    %v2784 = vpop.f32.mrb[0].mxu0
    %v2785 = vadd.f32 %v1989, %v2784
    %v2786 = vpop.f32.mrb[0].mxu0
    %v2787 = vadd.f32 %v1993, %v2786
    %2788 = vdwg.mxu0
    %2789 = vmatprep.subr.bf16.mxu0 %v2413
    %2790 = vmatpush1.bf16.msra.mxu0 %v2412
    %2791 = vmatprep.subr.bf16.mxu0 %v2415
    %2792 = vmatpush1.bf16.msra.mxu0 %v2414
    %2793 = vmatprep.subr.bf16.mxu0 %v2417
    %2794 = vmatpush1.bf16.msra.mxu0 %v2416
    %2795 = vmatprep.subr.bf16.mxu0 %v2419
    %2796 = vmatpush1.bf16.msra.mxu0 %v2418
    %2797 = vmatprep.subr.bf16.mxu0 %v2421
    %2798 = vmatpush1.bf16.msra.mxu0 %v2420
    %2799 = vmatprep.subr.bf16.mxu0 %v2423
    %2800 = vmatpush1.bf16.msra.mxu0 %v2422
    %2801 = vmatprep.subr.bf16.mxu0 %v2425
    %2802 = vmatpush1.bf16.msra.mxu0 %v2424
    %2803 = vmatprep.subr.bf16.mxu0 %v2427
    %2804 = vmatpush1.bf16.msra.mxu0 %v2426
    %2805 = vmatprep.subr.bf16.mxu0 %v2429
    %2806 = vmatpush1.bf16.msra.mxu0 %v2428
    %2807 = vmatprep.subr.bf16.mxu0 %v2431
    %2808 = vmatpush1.bf16.msra.mxu0 %v2430
    %2809 = vmatprep.subr.bf16.mxu0 %v2433
    %2810 = vmatpush1.bf16.msra.mxu0 %v2432
    %2811 = vmatprep.subr.bf16.mxu0 %v2435
    %2812 = vmatpush1.bf16.msra.mxu0 %v2434
    %2813 = vmatprep.subr.bf16.mxu0 %v2437
    %2814 = vmatpush1.bf16.msra.mxu0 %v2436
    %2815 = vmatprep.subr.bf16.mxu0 %v2439
    %2816 = vmatpush1.bf16.msra.mxu0 %v2438
    %2817 = vmatprep.subr.bf16.mxu0 %v2441
    %2818 = vmatpush1.bf16.msra.mxu0 %v2440
    %2819 = vmatprep.subr.bf16.mxu0 %v2443
    %2820 = vmatpush1.bf16.msra.mxu0 %v2442
    %2821 = vmatprep.mubr.bf16.mxu0 %v1763
    %2822 = vmatmul.mubr.bf16.gmra.mrb[0].mxu0 %v1762
    %v2823 = vpop.f32.mrb[0].mxu0
    %v2824 = vadd.f32 %v2671, %v2823
    %v2825 = vpop.f32.mrb[0].mxu0
    %v2826 = vadd.f32 %v2673, %v2825
    %v2827 = vpop.f32.mrb[0].mxu0
    %v2828 = vadd.f32 %v2675, %v2827
    %v2829 = vpop.f32.mrb[0].mxu0
    %v2830 = vadd.f32 %v2677, %v2829
    %2831 = vmatprep.mubr.bf16.mxu0 %v1771
    %2832 = vmatmul.mubr.bf16.gmra.mrb[0].mxu0 %v1770
    %v2833 = vpop.f32.mrb[0].mxu0
    %v2834 = vadd.f32 %v2681, %v2833
    %v2835 = vpop.f32.mrb[0].mxu0
    %v2836 = vadd.f32 %v2683, %v2835
    %v2837 = vpop.f32.mrb[0].mxu0
    %v2838 = vadd.f32 %v2685, %v2837
    %v2839 = vpop.f32.mrb[0].mxu0
    %v2840 = vadd.f32 %v2687, %v2839
    %2841 = vmatprep.mubr.bf16.mxu0 %v1779
    %2842 = vmatmul.mubr.bf16.gmra.mrb[0].mxu0 %v1778
    %v2843 = vpop.f32.mrb[0].mxu0
    %v2844 = vadd.f32 %v2691, %v2843
    %v2845 = vpop.f32.mrb[0].mxu0
    %v2846 = vadd.f32 %v2693, %v2845
    %v2847 = vpop.f32.mrb[0].mxu0
    %v2848 = vadd.f32 %v2695, %v2847
    %v2849 = vpop.f32.mrb[0].mxu0
    %v2850 = vadd.f32 %v2697, %v2849
    %2851 = vmatprep.mubr.bf16.mxu0 %v1787
    %2852 = vmatmul.mubr.bf16.gmra.mrb[0].mxu0 %v1786
    %v2853 = vpop.f32.mrb[0].mxu0
    %v2854 = vadd.f32 %v2701, %v2853
    %v2855 = vpop.f32.mrb[0].mxu0
    %v2856 = vadd.f32 %v2703, %v2855
    %v2857 = vpop.f32.mrb[0].mxu0
    %v2858 = vadd.f32 %v2705, %v2857
    %v2859 = vpop.f32.mrb[0].mxu0
    %v2860 = vadd.f32 %v2707, %v2859
    %2861 = vmatprep.mubr.bf16.mxu0 %v1795
    %2862 = vmatmul.mubr.bf16.gmra.mrb[0].mxu0 %v1794
    %v2863 = vpop.f32.mrb[0].mxu0
    %v2864 = vadd.f32 %v2711, %v2863
    %v2865 = vpop.f32.mrb[0].mxu0
    %v2866 = vadd.f32 %v2713, %v2865
    %v2867 = vpop.f32.mrb[0].mxu0
    %v2868 = vadd.f32 %v2715, %v2867
    %v2869 = vpop.f32.mrb[0].mxu0
    %v2870 = vadd.f32 %v2717, %v2869
    %2871 = vmatprep.mubr.bf16.mxu0 %v1803
    %2872 = vmatmul.mubr.bf16.gmra.mrb[0].mxu0 %v1802
    %v2873 = vpop.f32.mrb[0].mxu0
    %v2874 = vadd.f32 %v2721, %v2873
    %v2875 = vpop.f32.mrb[0].mxu0
    %v2876 = vadd.f32 %v2723, %v2875
    %v2877 = vpop.f32.mrb[0].mxu0
    %v2878 = vadd.f32 %v2725, %v2877
    %v2879 = vpop.f32.mrb[0].mxu0
    %v2880 = vadd.f32 %v2727, %v2879
    %2881 = vmatprep.mubr.bf16.mxu0 %v1811
    %2882 = vmatmul.mubr.bf16.gmra.mrb[0].mxu0 %v1810
    %v2883 = vpop.f32.mrb[0].mxu0
    %v2884 = vadd.f32 %v2731, %v2883
    %v2885 = vpop.f32.mrb[0].mxu0
    %v2886 = vadd.f32 %v2733, %v2885
    %v2887 = vpop.f32.mrb[0].mxu0
    %v2888 = vadd.f32 %v2735, %v2887
    %v2889 = vpop.f32.mrb[0].mxu0
    %v2890 = vadd.f32 %v2737, %v2889
    %2891 = vmatprep.mubr.bf16.mxu0 %v1819
    %2892 = vmatmul.mubr.bf16.gmra.mrb[0].mxu0 %v1818
    %v2893 = vpop.f32.mrb[0].mxu0
    %v2894 = vadd.f32 %v2741, %v2893
    %v2895 = vpop.f32.mrb[0].mxu0
    %v2896 = vadd.f32 %v2743, %v2895
    %v2897 = vpop.f32.mrb[0].mxu0
    %v2898 = vadd.f32 %v2745, %v2897
    %v2899 = vpop.f32.mrb[0].mxu0
    %v2900 = vadd.f32 %v2747, %v2899
    %2901 = vmatprep.mubr.bf16.mxu0 %v1827
    %2902 = vmatmul.mubr.bf16.gmra.mrb[0].mxu0 %v1826
    %v2903 = vpop.f32.mrb[0].mxu0
    %v2904 = vadd.f32 %v2751, %v2903
    %v2905 = vpop.f32.mrb[0].mxu0
    %v2906 = vadd.f32 %v2753, %v2905
    %v2907 = vpop.f32.mrb[0].mxu0
    %v2908 = vadd.f32 %v2755, %v2907
    %v2909 = vpop.f32.mrb[0].mxu0
    %v2910 = vadd.f32 %v2757, %v2909
    %2911 = vmatprep.mubr.bf16.mxu0 %v1835
    %2912 = vmatmul.mubr.bf16.gmra.mrb[0].mxu0 %v1834
    %v2913 = vpop.f32.mrb[0].mxu0
    %v2914 = vadd.f32 %v2761, %v2913
    %v2915 = vpop.f32.mrb[0].mxu0
    %v2916 = vadd.f32 %v2763, %v2915
    %v2917 = vpop.f32.mrb[0].mxu0
    %v2918 = vadd.f32 %v2765, %v2917
    %v2919 = vpop.f32.mrb[0].mxu0
    %v2920 = vadd.f32 %v2767, %v2919
    %2921 = vmatprep.mubr.bf16.mxu0 %v1843
    %2922 = vmatmul.mubr.bf16.gmra.mrb[0].mxu0 %v1842
    %v2923 = vpop.f32.mrb[0].mxu0
    %v2924 = vadd.f32 %v2771, %v2923
    %v2925 = vpop.f32.mrb[0].mxu0
    %v2926 = vadd.f32 %v2773, %v2925
    %v2927 = vpop.f32.mrb[0].mxu0
    %v2928 = vadd.f32 %v2775, %v2927
    %v2929 = vpop.f32.mrb[0].mxu0
    %v2930 = vadd.f32 %v2777, %v2929
    %2931 = vmatprep.mubr.bf16.mxu0 %v1851
    %2932 = vmatmul.mubr.bf16.gmra.mrb[0].mxu0 %v1850
    %v2933 = vpop.f32.mrb[0].mxu0
    %v2934 = vadd.f32 %v2781, %v2933
    %v2935 = vpop.f32.mrb[0].mxu0
    %v2936 = vadd.f32 %v2783, %v2935
    %v2937 = vpop.f32.mrb[0].mxu0
    %v2938 = vadd.f32 %v2785, %v2937
    %v2939 = vpop.f32.mrb[0].mxu0
    %v2940 = vadd.f32 %v2787, %v2939
    %2941 = vdwg.mxu0
    %2942 = vmatprep.subr.bf16.mxu0 %v2445
    %2943 = vmatpush1.bf16.msra.mxu0 %v2444
    %2944 = vmatprep.subr.bf16.mxu0 %v2447
    %2945 = vmatpush1.bf16.msra.mxu0 %v2446
    %2946 = vmatprep.subr.bf16.mxu0 %v2449
    %2947 = vmatpush1.bf16.msra.mxu0 %v2448
    %2948 = vmatprep.subr.bf16.mxu0 %v2451
    %2949 = vmatpush1.bf16.msra.mxu0 %v2450
    %2950 = vmatprep.subr.bf16.mxu0 %v2453
    %2951 = vmatpush1.bf16.msra.mxu0 %v2452
    %2952 = vmatprep.subr.bf16.mxu0 %v2455
    %2953 = vmatpush1.bf16.msra.mxu0 %v2454
    %2954 = vmatprep.subr.bf16.mxu0 %v2457
    %2955 = vmatpush1.bf16.msra.mxu0 %v2456
    %2956 = vmatprep.subr.bf16.mxu0 %v2459
    %2957 = vmatpush1.bf16.msra.mxu0 %v2458
    %2958 = vmatprep.subr.bf16.mxu0 %v2461
    %2959 = vmatpush1.bf16.msra.mxu0 %v2460
    %2960 = vmatprep.subr.bf16.mxu0 %v2463
    %2961 = vmatpush1.bf16.msra.mxu0 %v2462
    %2962 = vmatprep.subr.bf16.mxu0 %v2465
    %2963 = vmatpush1.bf16.msra.mxu0 %v2464
    %2964 = vmatprep.subr.bf16.mxu0 %v2467
    %2965 = vmatpush1.bf16.msra.mxu0 %v2466
    %2966 = vmatprep.subr.bf16.mxu0 %v2469
    %2967 = vmatpush1.bf16.msra.mxu0 %v2468
    %2968 = vmatprep.subr.bf16.mxu0 %v2471
    %2969 = vmatpush1.bf16.msra.mxu0 %v2470
    %2970 = vmatprep.subr.bf16.mxu0 %v2473
    %2971 = vmatpush1.bf16.msra.mxu0 %v2472
    %2972 = vmatprep.subr.bf16.mxu0 %v2475
    %2973 = vmatpush1.bf16.msra.mxu0 %v2474
    %2974 = vmatprep.mubr.bf16.mxu0 %v1765
    %2975 = vmatmul.mubr.bf16.gmra.mrb[0].mxu0 %v1764
    %v2976 = vpop.f32.mrb[0].mxu0
    %v2977 = vadd.f32 %v2824, %v2976
    %v2978 = vpop.f32.mrb[0].mxu0
    %v2979 = vadd.f32 %v2826, %v2978
    %v2980 = vpop.f32.mrb[0].mxu0
    %v2981 = vadd.f32 %v2828, %v2980
    %v2982 = vpop.f32.mrb[0].mxu0
    %v2983 = vadd.f32 %v2830, %v2982
    %2984 = vmatprep.mubr.bf16.mxu0 %v1773
    %2985 = vmatmul.mubr.bf16.gmra.mrb[0].mxu0 %v1772
    %v2986 = vpop.f32.mrb[0].mxu0
    %v2987 = vadd.f32 %v2834, %v2986
    %v2988 = vpop.f32.mrb[0].mxu0
    %v2989 = vadd.f32 %v2836, %v2988
    %v2990 = vpop.f32.mrb[0].mxu0
    %v2991 = vadd.f32 %v2838, %v2990
    %v2992 = vpop.f32.mrb[0].mxu0
    %v2993 = vadd.f32 %v2840, %v2992
    %2994 = vmatprep.mubr.bf16.mxu0 %v1781
    %2995 = vmatmul.mubr.bf16.gmra.mrb[0].mxu0 %v1780
    %v2996 = vpop.f32.mrb[0].mxu0
    %v2997 = vadd.f32 %v2844, %v2996
    %v2998 = vpop.f32.mrb[0].mxu0
    %v2999 = vadd.f32 %v2846, %v2998
    %v3000 = vpop.f32.mrb[0].mxu0
    %v3001 = vadd.f32 %v2848, %v3000
    %v3002 = vpop.f32.mrb[0].mxu0
    %v3003 = vadd.f32 %v2850, %v3002
    %3004 = vmatprep.mubr.bf16.mxu0 %v1789
    %3005 = vmatmul.mubr.bf16.gmra.mrb[0].mxu0 %v1788
    %v3006 = vpop.f32.mrb[0].mxu0
    %v3007 = vadd.f32 %v2854, %v3006
    %v3008 = vpop.f32.mrb[0].mxu0
    %v3009 = vadd.f32 %v2856, %v3008
    %v3010 = vpop.f32.mrb[0].mxu0
    %v3011 = vadd.f32 %v2858, %v3010
    %v3012 = vpop.f32.mrb[0].mxu0
    %v3013 = vadd.f32 %v2860, %v3012
    %3014 = vmatprep.mubr.bf16.mxu0 %v1797
    %3015 = vmatmul.mubr.bf16.gmra.mrb[0].mxu0 %v1796
    %v3016 = vpop.f32.mrb[0].mxu0
    %v3017 = vadd.f32 %v2864, %v3016
    %v3018 = vpop.f32.mrb[0].mxu0
    %v3019 = vadd.f32 %v2866, %v3018
    %v3020 = vpop.f32.mrb[0].mxu0
    %v3021 = vadd.f32 %v2868, %v3020
    %v3022 = vpop.f32.mrb[0].mxu0
    %v3023 = vadd.f32 %v2870, %v3022
    %3024 = vmatprep.mubr.bf16.mxu0 %v1805
    %3025 = vmatmul.mubr.bf16.gmra.mrb[0].mxu0 %v1804
    %v3026 = vpop.f32.mrb[0].mxu0
    %v3027 = vadd.f32 %v2874, %v3026
    %v3028 = vpop.f32.mrb[0].mxu0
    %v3029 = vadd.f32 %v2876, %v3028
    %v3030 = vpop.f32.mrb[0].mxu0
    %v3031 = vadd.f32 %v2878, %v3030
    %v3032 = vpop.f32.mrb[0].mxu0
    %v3033 = vadd.f32 %v2880, %v3032
    %3034 = vmatprep.mubr.bf16.mxu0 %v1813
    %3035 = vmatmul.mubr.bf16.gmra.mrb[0].mxu0 %v1812
    %v3036 = vpop.f32.mrb[0].mxu0
    %v3037 = vadd.f32 %v2884, %v3036
    %v3038 = vpop.f32.mrb[0].mxu0
    %v3039 = vadd.f32 %v2886, %v3038
    %v3040 = vpop.f32.mrb[0].mxu0
    %v3041 = vadd.f32 %v2888, %v3040
    %v3042 = vpop.f32.mrb[0].mxu0
    %v3043 = vadd.f32 %v2890, %v3042
    %3044 = vmatprep.mubr.bf16.mxu0 %v1821
    %3045 = vmatmul.mubr.bf16.gmra.mrb[0].mxu0 %v1820
    %v3046 = vpop.f32.mrb[0].mxu0
    %v3047 = vadd.f32 %v2894, %v3046
    %v3048 = vpop.f32.mrb[0].mxu0
    %v3049 = vadd.f32 %v2896, %v3048
    %v3050 = vpop.f32.mrb[0].mxu0
    %v3051 = vadd.f32 %v2898, %v3050
    %v3052 = vpop.f32.mrb[0].mxu0
    %v3053 = vadd.f32 %v2900, %v3052
    %3054 = vmatprep.mubr.bf16.mxu0 %v1829
    %3055 = vmatmul.mubr.bf16.gmra.mrb[0].mxu0 %v1828
    %v3056 = vpop.f32.mrb[0].mxu0
    %v3057 = vadd.f32 %v2904, %v3056
    %v3058 = vpop.f32.mrb[0].mxu0
    %v3059 = vadd.f32 %v2906, %v3058
    %v3060 = vpop.f32.mrb[0].mxu0
    %v3061 = vadd.f32 %v2908, %v3060
    %v3062 = vpop.f32.mrb[0].mxu0
    %v3063 = vadd.f32 %v2910, %v3062
    %3064 = vmatprep.mubr.bf16.mxu0 %v1837
    %3065 = vmatmul.mubr.bf16.gmra.mrb[0].mxu0 %v1836
    %v3066 = vpop.f32.mrb[0].mxu0
    %v3067 = vadd.f32 %v2914, %v3066
    %v3068 = vpop.f32.mrb[0].mxu0
    %v3069 = vadd.f32 %v2916, %v3068
    %v3070 = vpop.f32.mrb[0].mxu0
    %v3071 = vadd.f32 %v2918, %v3070
    %v3072 = vpop.f32.mrb[0].mxu0
    %v3073 = vadd.f32 %v2920, %v3072
    %3074 = vmatprep.mubr.bf16.mxu0 %v1845
    %3075 = vmatmul.mubr.bf16.gmra.mrb[0].mxu0 %v1844
    %v3076 = vpop.f32.mrb[0].mxu0
    %v3077 = vadd.f32 %v2924, %v3076
    %v3078 = vpop.f32.mrb[0].mxu0
    %v3079 = vadd.f32 %v2926, %v3078
    %v3080 = vpop.f32.mrb[0].mxu0
    %v3081 = vadd.f32 %v2928, %v3080
    %v3082 = vpop.f32.mrb[0].mxu0
    %v3083 = vadd.f32 %v2930, %v3082
    %3084 = vmatprep.mubr.bf16.mxu0 %v1853
    %3085 = vmatmul.mubr.bf16.gmra.mrb[0].mxu0 %v1852
    %v3086 = vpop.f32.mrb[0].mxu0
    %v3087 = vadd.f32 %v2934, %v3086
    %v3088 = vpop.f32.mrb[0].mxu0
    %v3089 = vadd.f32 %v2936, %v3088
    %v3090 = vpop.f32.mrb[0].mxu0
    %v3091 = vadd.f32 %v2938, %v3090
    %v3092 = vpop.f32.mrb[0].mxu0
    %v3093 = vadd.f32 %v2940, %v3092
    %3094 = vdwg.mxu0
    %3095 = vmatprep.subr.bf16.mxu0 %v2477
    %3096 = vmatpush1.bf16.msra.mxu0 %v2476
    %3097 = vmatprep.subr.bf16.mxu0 %v2479
    %3098 = vmatpush1.bf16.msra.mxu0 %v2478
    %3099 = vmatprep.subr.bf16.mxu0 %v2481
    %3100 = vmatpush1.bf16.msra.mxu0 %v2480
    %3101 = vmatprep.subr.bf16.mxu0 %v2483
    %3102 = vmatpush1.bf16.msra.mxu0 %v2482
    %3103 = vmatprep.subr.bf16.mxu0 %v2485
    %3104 = vmatpush1.bf16.msra.mxu0 %v2484
    %3105 = vmatprep.subr.bf16.mxu0 %v2487
    %3106 = vmatpush1.bf16.msra.mxu0 %v2486
    %3107 = vmatprep.subr.bf16.mxu0 %v2489
    %3108 = vmatpush1.bf16.msra.mxu0 %v2488
    %3109 = vmatprep.subr.bf16.mxu0 %v2491
    %3110 = vmatpush1.bf16.msra.mxu0 %v2490
    %3111 = vmatprep.subr.bf16.mxu0 %v2493
    %3112 = vmatpush1.bf16.msra.mxu0 %v2492
    %3113 = vmatprep.subr.bf16.mxu0 %v2495
    %3114 = vmatpush1.bf16.msra.mxu0 %v2494
    %3115 = vmatprep.subr.bf16.mxu0 %v2497
    %3116 = vmatpush1.bf16.msra.mxu0 %v2496
    %3117 = vmatprep.subr.bf16.mxu0 %v2499
    %3118 = vmatpush1.bf16.msra.mxu0 %v2498
    %3119 = vmatprep.subr.bf16.mxu0 %v2501
    %3120 = vmatpush1.bf16.msra.mxu0 %v2500
    %3121 = vmatprep.subr.bf16.mxu0 %v2503
    %3122 = vmatpush1.bf16.msra.mxu0 %v2502
    %3123 = vmatprep.subr.bf16.mxu0 %v2505
    %3124 = vmatpush1.bf16.msra.mxu0 %v2504
    %3125 = vmatprep.subr.bf16.mxu0 %v2507
    %3126 = vmatpush1.bf16.msra.mxu0 %v2506
    %3127 = vmatprep.mubr.bf16.mxu0 %v1767
    %3128 = vmatmul.mubr.bf16.gmra.mrb[0].mxu0 %v1766
    %v3129 = vpop.f32.mrb[0].mxu0
    %v3130 = vadd.f32 %v2977, %v3129
    %v3131 = vpop.f32.mrb[0].mxu0
    %v3132 = vadd.f32 %v2979, %v3131
    %v3133 = vpop.f32.mrb[0].mxu0
    %v3134 = vadd.f32 %v2981, %v3133
    %v3135 = vpop.f32.mrb[0].mxu0
    %v3136 = vadd.f32 %v2983, %v3135
    %3137 = vmatprep.mubr.bf16.mxu0 %v1775
    %3138 = vmatmul.mubr.bf16.gmra.mrb[0].mxu0 %v1774
    %v3139 = vpop.f32.mrb[0].mxu0
    %v3140 = vadd.f32 %v2987, %v3139
    %v3141 = vpop.f32.mrb[0].mxu0
    %v3142 = vadd.f32 %v2989, %v3141
    %v3143 = vpop.f32.mrb[0].mxu0
    %v3144 = vadd.f32 %v2991, %v3143
    %v3145 = vpop.f32.mrb[0].mxu0
    %v3146 = vadd.f32 %v2993, %v3145
    %3147 = vmatprep.mubr.bf16.mxu0 %v1783
    %3148 = vmatmul.mubr.bf16.gmra.mrb[0].mxu0 %v1782
    %v3149 = vpop.f32.mrb[0].mxu0
    %v3150 = vadd.f32 %v2997, %v3149
    %v3151 = vpop.f32.mrb[0].mxu0
    %v3152 = vadd.f32 %v2999, %v3151
    %v3153 = vpop.f32.mrb[0].mxu0
    %v3154 = vadd.f32 %v3001, %v3153
    %v3155 = vpop.f32.mrb[0].mxu0
    %v3156 = vadd.f32 %v3003, %v3155
    %3157 = vmatprep.mubr.bf16.mxu0 %v1791
    %3158 = vmatmul.mubr.bf16.gmra.mrb[0].mxu0 %v1790
    %v3159 = vpop.f32.mrb[0].mxu0
    %v3160 = vadd.f32 %v3007, %v3159
    %v3161 = vpop.f32.mrb[0].mxu0
    %v3162 = vadd.f32 %v3009, %v3161
    %v3163 = vpop.f32.mrb[0].mxu0
    %v3164 = vadd.f32 %v3011, %v3163
    %v3165 = vpop.f32.mrb[0].mxu0
    %v3166 = vadd.f32 %v3013, %v3165
    %3167 = vmatprep.mubr.bf16.mxu0 %v1799
    %3168 = vmatmul.mubr.bf16.gmra.mrb[0].mxu0 %v1798
    %v3169 = vpop.f32.mrb[0].mxu0
    %v3170 = vadd.f32 %v3017, %v3169
    %v3171 = vpop.f32.mrb[0].mxu0
    %v3172 = vadd.f32 %v3019, %v3171
    %v3173 = vpop.f32.mrb[0].mxu0
    %v3174 = vadd.f32 %v3021, %v3173
    %v3175 = vpop.f32.mrb[0].mxu0
    %v3176 = vadd.f32 %v3023, %v3175
    %3177 = vmatprep.mubr.bf16.mxu0 %v1807
    %3178 = vmatmul.mubr.bf16.gmra.mrb[0].mxu0 %v1806
    %v3179 = vpop.f32.mrb[0].mxu0
    %v3180 = vadd.f32 %v3027, %v3179
    %v3181 = vpop.f32.mrb[0].mxu0
    %v3182 = vadd.f32 %v3029, %v3181
    %v3183 = vpop.f32.mrb[0].mxu0
    %v3184 = vadd.f32 %v3031, %v3183
    %v3185 = vpop.f32.mrb[0].mxu0
    %v3186 = vadd.f32 %v3033, %v3185
    %3187 = vmatprep.mubr.bf16.mxu0 %v1815
    %3188 = vmatmul.mubr.bf16.gmra.mrb[0].mxu0 %v1814
    %v3189 = vpop.f32.mrb[0].mxu0
    %v3190 = vadd.f32 %v3037, %v3189
    %v3191 = vpop.f32.mrb[0].mxu0
    %v3192 = vadd.f32 %v3039, %v3191
    %v3193 = vpop.f32.mrb[0].mxu0
    %v3194 = vadd.f32 %v3041, %v3193
    %v3195 = vpop.f32.mrb[0].mxu0
    %v3196 = vadd.f32 %v3043, %v3195
    %3197 = vmatprep.mubr.bf16.mxu0 %v1823
    %3198 = vmatmul.mubr.bf16.gmra.mrb[0].mxu0 %v1822
    %v3199 = vpop.f32.mrb[0].mxu0
    %v3200 = vadd.f32 %v3047, %v3199
    %v3201 = vpop.f32.mrb[0].mxu0
    %v3202 = vadd.f32 %v3049, %v3201
    %v3203 = vpop.f32.mrb[0].mxu0
    %v3204 = vadd.f32 %v3051, %v3203
    %v3205 = vpop.f32.mrb[0].mxu0
    %v3206 = vadd.f32 %v3053, %v3205
    %3207 = vmatprep.mubr.bf16.mxu0 %v1831
    %3208 = vmatmul.mubr.bf16.gmra.mrb[0].mxu0 %v1830
    %v3209 = vpop.f32.mrb[0].mxu0
    %v3210 = vadd.f32 %v3057, %v3209
    %v3211 = vpop.f32.mrb[0].mxu0
    %v3212 = vadd.f32 %v3059, %v3211
    %v3213 = vpop.f32.mrb[0].mxu0
    %v3214 = vadd.f32 %v3061, %v3213
    %v3215 = vpop.f32.mrb[0].mxu0
    %v3216 = vadd.f32 %v3063, %v3215
    %3217 = vmatprep.mubr.bf16.mxu0 %v1839
    %3218 = vmatmul.mubr.bf16.gmra.mrb[0].mxu0 %v1838
    %v3219 = vpop.f32.mrb[0].mxu0
    %v3220 = vadd.f32 %v3067, %v3219
    %v3221 = vpop.f32.mrb[0].mxu0
    %v3222 = vadd.f32 %v3069, %v3221
    %v3223 = vpop.f32.mrb[0].mxu0
    %v3224 = vadd.f32 %v3071, %v3223
    %v3225 = vpop.f32.mrb[0].mxu0
    %v3226 = vadd.f32 %v3073, %v3225
    %3227 = vmatprep.mubr.bf16.mxu0 %v1847
    %3228 = vmatmul.mubr.bf16.gmra.mrb[0].mxu0 %v1846
    %v3229 = vpop.f32.mrb[0].mxu0
    %v3230 = vadd.f32 %v3077, %v3229
    %v3231 = vpop.f32.mrb[0].mxu0
    %v3232 = vadd.f32 %v3079, %v3231
    %v3233 = vpop.f32.mrb[0].mxu0
    %v3234 = vadd.f32 %v3081, %v3233
    %v3235 = vpop.f32.mrb[0].mxu0
    %v3236 = vadd.f32 %v3083, %v3235
    %3237 = vmatprep.mubr.bf16.mxu0 %v1855
    %3238 = vmatmul.mubr.bf16.gmra.mrb[0].mxu0 %v1854
    %v3239 = vpop.f32.mrb[0].mxu0
    %v3240 = vadd.f32 %v3087, %v3239
    %v3241 = vpop.f32.mrb[0].mxu0
    %v3242 = vadd.f32 %v3089, %v3241
    %v3243 = vpop.f32.mrb[0].mxu0
    %v3244 = vadd.f32 %v3091, %v3243
    %v3245 = vpop.f32.mrb[0].mxu0
    %v3246 = vadd.f32 %v3093, %v3245
    %3247 = vdwg.mxu0
    %3248 = vst [vmem:[#allocation10] sm:$0xff] %v3130
    %3249 = vst [vmem:[#allocation10 + $0x8] sm:$0xff] %v3132
    %3250 = vst [vmem:[#allocation10 + $0x10] sm:$0xff] %v3134
    %3251 = vst [vmem:[#allocation10 + $0x18] sm:$0xff] %v3136
    %3252 = vst [vmem:[#allocation10 + $0x20] sm:$0xff] %v3140
    %3253 = vst [vmem:[#allocation10 + $0x28] sm:$0xff] %v3142
    %3254 = vst [vmem:[#allocation10 + $0x30] sm:$0xff] %v3144
    %3255 = vst [vmem:[#allocation10 + $0x38] sm:$0xff] %v3146
    %3256 = vst [vmem:[#allocation10 + $0x40] sm:$0xff] %v3150
    %3257 = vst [vmem:[#allocation10 + $0x48] sm:$0xff] %v3152
    %3258 = vst [vmem:[#allocation10 + $0x50] sm:$0xff] %v3154
    %3259 = vst [vmem:[#allocation10 + $0x58] sm:$0xff] %v3156
    %3260 = vst [vmem:[#allocation10 + $0x60] sm:$0xff] %v3160
    %3261 = vst [vmem:[#allocation10 + $0x68] sm:$0xff] %v3162
    %3262 = vst [vmem:[#allocation10 + $0x70] sm:$0xff] %v3164
    %3263 = vst [vmem:[#allocation10 + $0x78] sm:$0xff] %v3166
    %3264 = vst [vmem:[#allocation10 + $0x80] sm:$0xff] %v3170
    %3265 = vst [vmem:[#allocation10 + $0x88] sm:$0xff] %v3172
    %3266 = vst [vmem:[#allocation10 + $0x90] sm:$0xff] %v3174
    %3267 = vst [vmem:[#allocation10 + $0x98] sm:$0xff] %v3176
    %3268 = vst [vmem:[#allocation10 + $0xa0] sm:$0xff] %v3180
    %3269 = vst [vmem:[#allocation10 + $0xa8] sm:$0xff] %v3182
    %3270 = vst [vmem:[#allocation10 + $0xb0] sm:$0xff] %v3184
    %3271 = vst [vmem:[#allocation10 + $0xb8] sm:$0xff] %v3186
    %3272 = vst [vmem:[#allocation10 + $0xc0] sm:$0xff] %v3190
    %3273 = vst [vmem:[#allocation10 + $0xc8] sm:$0xff] %v3192
    %3274 = vst [vmem:[#allocation10 + $0xd0] sm:$0xff] %v3194
    %3275 = vst [vmem:[#allocation10 + $0xd8] sm:$0xff] %v3196
    %3276 = vst [vmem:[#allocation10 + $0xe0] sm:$0xff] %v3200
    %3277 = vst [vmem:[#allocation10 + $0xe8] sm:$0xff] %v3202
    %3278 = vst [vmem:[#allocation10 + $0xf0] sm:$0xff] %v3204
    %3279 = vst [vmem:[#allocation10 + $0xf8] sm:$0xff] %v3206
    %3280 = vst [vmem:[#allocation10 + $0x100] sm:$0xff] %v3210
    %3281 = vst [vmem:[#allocation10 + $0x108] sm:$0xff] %v3212
    %3282 = vst [vmem:[#allocation10 + $0x110] sm:$0xff] %v3214
    %3283 = vst [vmem:[#allocation10 + $0x118] sm:$0xff] %v3216
    %3284 = vst [vmem:[#allocation10 + $0x120] sm:$0xff] %v3220
    %3285 = vst [vmem:[#allocation10 + $0x128] sm:$0xff] %v3222
    %3286 = vst [vmem:[#allocation10 + $0x130] sm:$0xff] %v3224
    %3287 = vst [vmem:[#allocation10 + $0x138] sm:$0xff] %v3226
    %3288 = vst [vmem:[#allocation10 + $0x140] sm:$0xff] %v3230
    %3289 = vst [vmem:[#allocation10 + $0x148] sm:$0xff] %v3232
    %3290 = vst [vmem:[#allocation10 + $0x150] sm:$0xff] %v3234
    %3291 = vst [vmem:[#allocation10 + $0x158] sm:$0xff] %v3236
    %3292 = vst [vmem:[#allocation10 + $0x160] sm:$0xff] %v3240
    %3293 = vst [vmem:[#allocation10 + $0x168] sm:$0xff] %v3242
    %3294 = vst [vmem:[#allocation10 + $0x170] sm:$0xff] %v3244
    %3295 = vst [vmem:[#allocation10 + $0x178] sm:$0xff] %v3246
    // Predicated region
    $region38: #{tpu_custom_call.1} parent=1 // pred_check
      _
    $region39: #{tpu_custom_call.1} parent=1 // pred_check_branch
      %3297 = sbr.rel (0) target = $region41
    $region40: #{tpu_custom_call.1} parent=1 // pred_region
      %s3299 = ssub.s32 6144, 6144
      %3300 = vsyncadd [#allocation4], %s3299
      %s3301 = sshll.u32 [#allocation10], 4
      %s3302 = int_to_ptr.vmem [resolvable:$true] %s3301
      %3307 = dma.vmem_to_hbm [thread:$0]  %s3302, 6144, %s5, [#allocation4], 256, 256, 16
    $region41: #{tpu_custom_call.1} parent=1 // pred_fallthru
      _
    // Predicated region
    $region42: #{tpu_custom_call.1} parent=1 // pred_check
      _
    $region43: #{tpu_custom_call.1} parent=1 // pred_check_branch
      %3309 = sbr.rel (0) target = $region45
    $region44: #{tpu_custom_call.1} parent=1 // pred_region
      %3310 = dma.done [#allocation4], 6144
    $region45: #{tpu_custom_call.1} parent=1 // pred_fallthru
      _
    %3311 = vsyncpa [#allocation3], 1
    %3312 = vsyncpa [#allocation6], 1
    %3313 = vsyncpa [#allocation9], 1
    %3314 = vsyncpa [#allocation4], 1

</llo_original>
